<compile_context>
chip_gen: v6e
topology: v6e:2x2x1
jax: 0.10.0
libtpu: 0.0.40
codegen_flags: <defaults>
</compile_context>

<pallas_src>
import functools

import jax
import jax.numpy as jnp
from jax import lax
from jax.experimental import pallas as pl
from jax.experimental.pallas import tpu as pltpu


# ----------------------------- Pallas kernel ---------------------------------

def _mhsa_kernel(x_ref, wq_ref, wk_ref, wv_ref, bq_ref, bk_ref, bv_ref,
                 wo_ref, bo_ref, out_ref, *, n_heads, head_size, mask):
    x = x_ref[0]                                   # (T, C) f32
    T = x.shape[0]
    hs = head_size
    inv_scale = 1.0 / (hs ** 0.5)

    # QKV projections (head-contiguous column layout prepared host-side).
    q = jnp.dot(x, wq_ref[...], preferred_element_type=jnp.float32) + bq_ref[...]
    k = jnp.dot(x, wk_ref[...], preferred_element_type=jnp.float32) + bk_ref[...]
    v = jnp.dot(x, wv_ref[...], preferred_element_type=jnp.float32) + bv_ref[...]

    if mask:
        row = lax.broadcasted_iota(jnp.int32, (T, T), 0)
        col = lax.broadcasted_iota(jnp.int32, (T, T), 1)
        causal = col <= row                        # lower-triangular keep-mask

    # Per-head attention; n_heads is small & static -> unrolled, 2-D ops only.
    head_outs = []
    for h in range(n_heads):
        sl = slice(h * hs, (h + 1) * hs)
        qh, kh, vh = q[:, sl], k[:, sl], v[:, sl]  # (T, hs) each

        # scores = qh @ kh^T / sqrt(hs)   (contraction on last dim of both)
        s = lax.dot_general(qh, kh, (((1,), (1,)), ((), ())),
                            preferred_element_type=jnp.float32) * inv_scale
        if mask:
            s = jnp.where(causal, s, -1000000000.0)

        # numerically-stable softmax along the key axis
        m = jnp.max(s, axis=-1, keepdims=True)
        p = jnp.exp(s - m)
        p = p / jnp.sum(p, axis=-1, keepdims=True)

        head_outs.append(jnp.dot(p, vh, preferred_element_type=jnp.float32))  # (T, hs)

    vals = jnp.concatenate(head_outs, axis=-1)     # (T, C), same layout as permute+reshape

    out = jnp.dot(vals, wo_ref[...], preferred_element_type=jnp.float32) + bo_ref[...]
    out_ref[0] = out.astype(out_ref.dtype)


# ------------------------------- wrapper --------------------------------------

def mhsa_pallas(x, W_qkv, b_qkv, W_o, b_o, n_heads, mask):
    """x: (B,T,C); W_qkv: (3C,C); b_qkv: (3C,); W_o: (C,C); b_o: (C,); mask: bool."""
    B, T, C = x.shape
    assert C % n_heads == 0, "n_embd % n_heads != 0"
    hs = C // n_heads

    # Host-side parameter preprocessing (free; replicates PyTorch's
    # reshape(B,T,H,3*hs) + chunk(3, dim=-1) column ordering).
    j = jnp.arange(C)
    base = (j // hs) * (3 * hs) + (j % hs)         # column index of q[d] within head h
    Wt = W_qkv.T                                   # (C, 3C) so that y = x @ Wt + b
    Wq, Wk, Wv = Wt[:, base], Wt[:, base + hs], Wt[:, base + 2 * hs]
    bq, bk, bv = b_qkv[base], b_qkv[base + hs], b_qkv[base + 2 * hs]
    Wo = W_o.T                                     # (C, C)

    kernel = functools.partial(_mhsa_kernel, n_heads=n_heads, head_size=hs, mask=mask)
    whole = lambda b: (0, 0)                       # weights resident across the grid

    return pl.pallas_call(
        kernel,
        out_shape=jax.ShapeDtypeStruct((B, T, C), jnp.float32),
        grid=(B,),
        in_specs=[
            pl.BlockSpec((1, T, C), lambda b: (b, 0, 0)),   # x, one batch row per step
            pl.BlockSpec((C, C), whole),                    # Wq
            pl.BlockSpec((C, C), whole),                    # Wk
            pl.BlockSpec((C, C), whole),                    # Wv
            pl.BlockSpec((1, C), whole),                    # bq
            pl.BlockSpec((1, C), whole),                    # bk
            pl.BlockSpec((1, C), whole),                    # bv
            pl.BlockSpec((C, C), whole),                    # Wo
            pl.BlockSpec((1, C), whole),                    # bo
        ],
        out_specs=pl.BlockSpec((1, T, C), lambda b: (b, 0, 0)),
        compiler_params=pltpu.CompilerParams(
            dimension_semantics=("parallel",)),
    )(x, Wq, Wk, Wv,
      bq.reshape(1, C), bk.reshape(1, C), bv.reshape(1, C),
      Wo, b_o.reshape(1, C))


# ------------------------- pure-JAX reference (PyTorch semantics) --------------

def mhsa_ref(x, W_qkv, b_qkv, W_o, b_o, n_heads, mask):
    B, T, C = x.shape
    hs = C // n_heads
    qkv = x @ W_qkv.T + b_qkv                                  # (B, T, 3C)
    qkv = qkv.reshape(B, T, n_heads, 3 * hs).transpose(0, 2, 1, 3)
    q, k, v = jnp.split(qkv, 3, axis=-1)                       # (B, H, T, hs)
    y = jnp.einsum('bhtd,bhsd->bhts', q, k) / (hs ** 0.5)
    if mask:
        m = jnp.tril(jnp.ones((T, T), dtype=bool))
        y = jnp.where(m[None, None], y, -1000000000.0)
    y = jax.nn.softmax(y, axis=-1)
    vals = jnp.einsum('bhts,bhsd->bhtd', y, v)
    vals = vals.transpose(0, 2, 1, 3).reshape(B, T, C)
    return vals @ W_o.T + b_o


# ----------------------------------- main --------------------------------------

if __name__ == "__main__":
    B, T, C, H = 2, 8, 32, 4                      # batch, seq, n_embd, n_heads

    key = jax.random.PRNGKey(0)
    kx, kw1, kb1, kw2, kb2 = jax.random.split(key, 5)
    x = jax.random.normal(kx, (B, T, C), dtype=jnp.float32)
    W_qkv = jax.random.normal(kw1, (3 * C, C), dtype=jnp.float32) * (1.0 / C ** 0.5)
    b_qkv = jax.random.normal(kb1, (3 * C,), dtype=jnp.float32) * 0.02
    W_o = jax.random.normal(kw2, (C, C), dtype=jnp.float32) * (1.0 / C ** 0.5)
    b_o = jax.random.normal(kb2, (C,), dtype=jnp.float32) * 0.02

    for mask in (True, False):
        out = mhsa_pallas(x, W_qkv, b_qkv, W_o, b_o, H, mask)
        out = jax.block_until_ready(out)
        ref = mhsa_ref(x, W_qkv, b_qkv, W_o, b_o, H, mask)
        assert out.shape == (B, T, C)
        assert jnp.allclose(out, ref, atol=1e-4, rtol=1e-4), f"mismatch (mask={mask})"

    print("KERNEL_OK")
</pallas_src>

<mosaic_0001>
module attributes {stable_mosaic.version = 11 : i64} {
  func.func @_mhsa_kernel(%arg0: i32, %arg1: memref<1x8x32xf32, #tpu.memory_space<vmem>>, %arg2: memref<32x32xf32, #tpu.memory_space<vmem>>, %arg3: memref<32x32xf32, #tpu.memory_space<vmem>>, %arg4: memref<32x32xf32, #tpu.memory_space<vmem>>, %arg5: memref<1x32xf32, #tpu.memory_space<vmem>>, %arg6: memref<1x32xf32, #tpu.memory_space<vmem>>, %arg7: memref<1x32xf32, #tpu.memory_space<vmem>>, %arg8: memref<32x32xf32, #tpu.memory_space<vmem>>, %arg9: memref<1x32xf32, #tpu.memory_space<vmem>>, %arg10: memref<1x8x32xf32, #tpu.memory_space<vmem>>) attributes {dimension_semantics = [#tpu.dimension_semantics<parallel>], iteration_bounds = array<i64: 2>, scalar_prefetch = 0 : i64, scratch_operands = 0 : i64, tpu.core_type = #tpu.core_type<tc>, window_params = [{transform_indices = @transform_0, window_bounds = array<i64: 1, 8, 32>}, {pipeline_mode = #tpu.pipeline_mode<synchronous>, transform_indices = @transform_1, window_bounds = array<i64: 32, 32>}, {pipeline_mode = #tpu.pipeline_mode<synchronous>, transform_indices = @transform_2, window_bounds = array<i64: 32, 32>}, {pipeline_mode = #tpu.pipeline_mode<synchronous>, transform_indices = @transform_3, window_bounds = array<i64: 32, 32>}, {pipeline_mode = #tpu.pipeline_mode<synchronous>, transform_indices = @transform_4, window_bounds = array<i64: 1, 32>}, {pipeline_mode = #tpu.pipeline_mode<synchronous>, transform_indices = @transform_5, window_bounds = array<i64: 1, 32>}, {pipeline_mode = #tpu.pipeline_mode<synchronous>, transform_indices = @transform_6, window_bounds = array<i64: 1, 32>}, {pipeline_mode = #tpu.pipeline_mode<synchronous>, transform_indices = @transform_7, window_bounds = array<i64: 32, 32>}, {pipeline_mode = #tpu.pipeline_mode<synchronous>, transform_indices = @transform_8, window_bounds = array<i64: 1, 32>}, {transform_indices = @transform_9, window_bounds = array<i64: 1, 8, 32>}]} {
    %c0 = arith.constant 0 : index
    %c0_0 = arith.constant 0 : index
    %c0_1 = arith.constant 0 : index
    %0 = vector.load %arg1[%c0, %c0_0, %c0_1] : memref<1x8x32xf32, #tpu.memory_space<vmem>>, vector<1x8x32xf32>
    %1 = vector.shape_cast %0 : vector<1x8x32xf32> to vector<8x32xf32>
    %c0_2 = arith.constant 0 : index
    %c0_3 = arith.constant 0 : index
    %2 = vector.load %arg2[%c0_2, %c0_3] : memref<32x32xf32, #tpu.memory_space<vmem>>, vector<32x32xf32>
    %cst = arith.constant dense<0.000000e+00> : vector<8x32xf32>
    %3 = tpu.matmul %1, %2, %cst {dimension_numbers = #tpu.dot_dimension_numbers<[1], [0], [0], [1], [0, 0, 1, 1], [], []>} : vector<8x32xf32>, vector<32x32xf32>, vector<8x32xf32> -> vector<8x32xf32>
    %c0_4 = arith.constant 0 : index
    %c0_5 = arith.constant 0 : index
    %4 = vector.load %arg5[%c0_4, %c0_5] : memref<1x32xf32, #tpu.memory_space<vmem>>, vector<1x32xf32>
    %5 = vector.broadcast %4 : vector<1x32xf32> to vector<8x32xf32>
    %6 = arith.addf %3, %5 : vector<8x32xf32>
    %c0_6 = arith.constant 0 : index
    %c0_7 = arith.constant 0 : index
    %7 = vector.load %arg3[%c0_6, %c0_7] : memref<32x32xf32, #tpu.memory_space<vmem>>, vector<32x32xf32>
    %cst_8 = arith.constant dense<0.000000e+00> : vector<8x32xf32>
    %8 = tpu.matmul %1, %7, %cst_8 {dimension_numbers = #tpu.dot_dimension_numbers<[1], [0], [0], [1], [0, 0, 1, 1], [], []>} : vector<8x32xf32>, vector<32x32xf32>, vector<8x32xf32> -> vector<8x32xf32>
    %c0_9 = arith.constant 0 : index
    %c0_10 = arith.constant 0 : index
    %9 = vector.load %arg6[%c0_9, %c0_10] : memref<1x32xf32, #tpu.memory_space<vmem>>, vector<1x32xf32>
    %10 = vector.broadcast %9 : vector<1x32xf32> to vector<8x32xf32>
    %11 = arith.addf %8, %10 : vector<8x32xf32>
    %c0_11 = arith.constant 0 : index
    %c0_12 = arith.constant 0 : index
    %12 = vector.load %arg4[%c0_11, %c0_12] : memref<32x32xf32, #tpu.memory_space<vmem>>, vector<32x32xf32>
    %cst_13 = arith.constant dense<0.000000e+00> : vector<8x32xf32>
    %13 = tpu.matmul %1, %12, %cst_13 {dimension_numbers = #tpu.dot_dimension_numbers<[1], [0], [0], [1], [0, 0, 1, 1], [], []>} : vector<8x32xf32>, vector<32x32xf32>, vector<8x32xf32> -> vector<8x32xf32>
    %c0_14 = arith.constant 0 : index
    %c0_15 = arith.constant 0 : index
    %14 = vector.load %arg7[%c0_14, %c0_15] : memref<1x32xf32, #tpu.memory_space<vmem>>, vector<1x32xf32>
    %15 = vector.broadcast %14 : vector<1x32xf32> to vector<8x32xf32>
    %16 = arith.addf %13, %15 : vector<8x32xf32>
    %17 = tpu.iota {dimensions = array<i32: 0>} : vector<8x8xi32>
    %18 = tpu.iota {dimensions = array<i32: 1>} : vector<8x8xi32>
    %19 = arith.cmpi sle, %18, %17 : vector<8x8xi32>
    %20 = vector.extract_strided_slice %6 {offsets = [0, 0], sizes = [8, 8], strides = [1, 1]} : vector<8x32xf32> to vector<8x8xf32>
    %21 = vector.extract_strided_slice %11 {offsets = [0, 0], sizes = [8, 8], strides = [1, 1]} : vector<8x32xf32> to vector<8x8xf32>
    %22 = vector.extract_strided_slice %16 {offsets = [0, 0], sizes = [8, 8], strides = [1, 1]} : vector<8x32xf32> to vector<8x8xf32>
    %cst_16 = arith.constant dense<0.000000e+00> : vector<8x8xf32>
    %23 = tpu.matmul %20, %21, %cst_16 {dimension_numbers = #tpu.dot_dimension_numbers<[1], [1], [0], [0], [0, 0, 1, 0], [], []>} : vector<8x8xf32>, vector<8x8xf32>, vector<8x8xf32> -> vector<8x8xf32>
    %cst_17 = arith.constant 0.353553385 : f32
    %24 = vector.broadcast %cst_17 : f32 to vector<8x8xf32>
    %25 = arith.mulf %23, %24 : vector<8x8xf32>
    %cst_18 = arith.constant -1.000000e+09 : f32
    %26 = vector.broadcast %cst_18 : f32 to vector<8x8xf32>
    %27 = arith.select %19, %25, %26 : vector<8x8xi1>, vector<8x8xf32>
    %cst_19 = arith.constant dense<0xFF800000> : vector<8xf32>
    %28 = vector.multi_reduction <maximumf>, %27, %cst_19 [1] : vector<8x8xf32> to vector<8xf32>
    %29 = vector.shape_cast %28 : vector<8xf32> to vector<8x1xf32>
    %30 = vector.broadcast %29 : vector<8x1xf32> to vector<8x8xf32>
    %31 = arith.subf %27, %30 : vector<8x8xf32>
    %32 = math.exp %31 : vector<8x8xf32>
    %cst_20 = arith.constant dense<0.000000e+00> : vector<8xf32>
    %33 = vector.multi_reduction <add>, %32, %cst_20 [1] : vector<8x8xf32> to vector<8xf32>
    %34 = vector.shape_cast %33 : vector<8xf32> to vector<8x1xf32>
    %35 = vector.broadcast %34 : vector<8x1xf32> to vector<8x8xf32>
    %36 = arith.divf %32, %35 : vector<8x8xf32>
    %cst_21 = arith.constant dense<0.000000e+00> : vector<8x8xf32>
    %37 = tpu.matmul %36, %22, %cst_21 {dimension_numbers = #tpu.dot_dimension_numbers<[1], [0], [0], [1], [0, 0, 1, 1], [], []>} : vector<8x8xf32>, vector<8x8xf32>, vector<8x8xf32> -> vector<8x8xf32>
    %38 = vector.extract_strided_slice %6 {offsets = [0, 8], sizes = [8, 8], strides = [1, 1]} : vector<8x32xf32> to vector<8x8xf32>
    %39 = vector.extract_strided_slice %11 {offsets = [0, 8], sizes = [8, 8], strides = [1, 1]} : vector<8x32xf32> to vector<8x8xf32>
    %40 = vector.extract_strided_slice %16 {offsets = [0, 8], sizes = [8, 8], strides = [1, 1]} : vector<8x32xf32> to vector<8x8xf32>
    %cst_22 = arith.constant dense<0.000000e+00> : vector<8x8xf32>
    %41 = tpu.matmul %38, %39, %cst_22 {dimension_numbers = #tpu.dot_dimension_numbers<[1], [1], [0], [0], [0, 0, 1, 0], [], []>} : vector<8x8xf32>, vector<8x8xf32>, vector<8x8xf32> -> vector<8x8xf32>
    %cst_23 = arith.constant 0.353553385 : f32
    %42 = vector.broadcast %cst_23 : f32 to vector<8x8xf32>
    %43 = arith.mulf %41, %42 : vector<8x8xf32>
    %cst_24 = arith.constant -1.000000e+09 : f32
    %44 = vector.broadcast %cst_24 : f32 to vector<8x8xf32>
    %45 = arith.select %19, %43, %44 : vector<8x8xi1>, vector<8x8xf32>
    %cst_25 = arith.constant dense<0xFF800000> : vector<8xf32>
    %46 = vector.multi_reduction <maximumf>, %45, %cst_25 [1] : vector<8x8xf32> to vector<8xf32>
    %47 = vector.shape_cast %46 : vector<8xf32> to vector<8x1xf32>
    %48 = vector.broadcast %47 : vector<8x1xf32> to vector<8x8xf32>
    %49 = arith.subf %45, %48 : vector<8x8xf32>
    %50 = math.exp %49 : vector<8x8xf32>
    %cst_26 = arith.constant dense<0.000000e+00> : vector<8xf32>
    %51 = vector.multi_reduction <add>, %50, %cst_26 [1] : vector<8x8xf32> to vector<8xf32>
    %52 = vector.shape_cast %51 : vector<8xf32> to vector<8x1xf32>
    %53 = vector.broadcast %52 : vector<8x1xf32> to vector<8x8xf32>
    %54 = arith.divf %50, %53 : vector<8x8xf32>
    %cst_27 = arith.constant dense<0.000000e+00> : vector<8x8xf32>
    %55 = tpu.matmul %54, %40, %cst_27 {dimension_numbers = #tpu.dot_dimension_numbers<[1], [0], [0], [1], [0, 0, 1, 1], [], []>} : vector<8x8xf32>, vector<8x8xf32>, vector<8x8xf32> -> vector<8x8xf32>
    %56 = vector.extract_strided_slice %6 {offsets = [0, 16], sizes = [8, 8], strides = [1, 1]} : vector<8x32xf32> to vector<8x8xf32>
    %57 = vector.extract_strided_slice %11 {offsets = [0, 16], sizes = [8, 8], strides = [1, 1]} : vector<8x32xf32> to vector<8x8xf32>
    %58 = vector.extract_strided_slice %16 {offsets = [0, 16], sizes = [8, 8], strides = [1, 1]} : vector<8x32xf32> to vector<8x8xf32>
    %cst_28 = arith.constant dense<0.000000e+00> : vector<8x8xf32>
    %59 = tpu.matmul %56, %57, %cst_28 {dimension_numbers = #tpu.dot_dimension_numbers<[1], [1], [0], [0], [0, 0, 1, 0], [], []>} : vector<8x8xf32>, vector<8x8xf32>, vector<8x8xf32> -> vector<8x8xf32>
    %cst_29 = arith.constant 0.353553385 : f32
    %60 = vector.broadcast %cst_29 : f32 to vector<8x8xf32>
    %61 = arith.mulf %59, %60 : vector<8x8xf32>
    %cst_30 = arith.constant -1.000000e+09 : f32
    %62 = vector.broadcast %cst_30 : f32 to vector<8x8xf32>
    %63 = arith.select %19, %61, %62 : vector<8x8xi1>, vector<8x8xf32>
    %cst_31 = arith.constant dense<0xFF800000> : vector<8xf32>
    %64 = vector.multi_reduction <maximumf>, %63, %cst_31 [1] : vector<8x8xf32> to vector<8xf32>
    %65 = vector.shape_cast %64 : vector<8xf32> to vector<8x1xf32>
    %66 = vector.broadcast %65 : vector<8x1xf32> to vector<8x8xf32>
    %67 = arith.subf %63, %66 : vector<8x8xf32>
    %68 = math.exp %67 : vector<8x8xf32>
    %cst_32 = arith.constant dense<0.000000e+00> : vector<8xf32>
    %69 = vector.multi_reduction <add>, %68, %cst_32 [1] : vector<8x8xf32> to vector<8xf32>
    %70 = vector.shape_cast %69 : vector<8xf32> to vector<8x1xf32>
    %71 = vector.broadcast %70 : vector<8x1xf32> to vector<8x8xf32>
    %72 = arith.divf %68, %71 : vector<8x8xf32>
    %cst_33 = arith.constant dense<0.000000e+00> : vector<8x8xf32>
    %73 = tpu.matmul %72, %58, %cst_33 {dimension_numbers = #tpu.dot_dimension_numbers<[1], [0], [0], [1], [0, 0, 1, 1], [], []>} : vector<8x8xf32>, vector<8x8xf32>, vector<8x8xf32> -> vector<8x8xf32>
    %74 = vector.extract_strided_slice %6 {offsets = [0, 24], sizes = [8, 8], strides = [1, 1]} : vector<8x32xf32> to vector<8x8xf32>
    %75 = vector.extract_strided_slice %11 {offsets = [0, 24], sizes = [8, 8], strides = [1, 1]} : vector<8x32xf32> to vector<8x8xf32>
    %76 = vector.extract_strided_slice %16 {offsets = [0, 24], sizes = [8, 8], strides = [1, 1]} : vector<8x32xf32> to vector<8x8xf32>
    %cst_34 = arith.constant dense<0.000000e+00> : vector<8x8xf32>
    %77 = tpu.matmul %74, %75, %cst_34 {dimension_numbers = #tpu.dot_dimension_numbers<[1], [1], [0], [0], [0, 0, 1, 0], [], []>} : vector<8x8xf32>, vector<8x8xf32>, vector<8x8xf32> -> vector<8x8xf32>
    %cst_35 = arith.constant 0.353553385 : f32
    %78 = vector.broadcast %cst_35 : f32 to vector<8x8xf32>
    %79 = arith.mulf %77, %78 : vector<8x8xf32>
    %cst_36 = arith.constant -1.000000e+09 : f32
    %80 = vector.broadcast %cst_36 : f32 to vector<8x8xf32>
    %81 = arith.select %19, %79, %80 : vector<8x8xi1>, vector<8x8xf32>
    %cst_37 = arith.constant dense<0xFF800000> : vector<8xf32>
    %82 = vector.multi_reduction <maximumf>, %81, %cst_37 [1] : vector<8x8xf32> to vector<8xf32>
    %83 = vector.shape_cast %82 : vector<8xf32> to vector<8x1xf32>
    %84 = vector.broadcast %83 : vector<8x1xf32> to vector<8x8xf32>
    %85 = arith.subf %81, %84 : vector<8x8xf32>
    %86 = math.exp %85 : vector<8x8xf32>
    %cst_38 = arith.constant dense<0.000000e+00> : vector<8xf32>
    %87 = vector.multi_reduction <add>, %86, %cst_38 [1] : vector<8x8xf32> to vector<8xf32>
    %88 = vector.shape_cast %87 : vector<8xf32> to vector<8x1xf32>
    %89 = vector.broadcast %88 : vector<8x1xf32> to vector<8x8xf32>
    %90 = arith.divf %86, %89 : vector<8x8xf32>
    %cst_39 = arith.constant dense<0.000000e+00> : vector<8x8xf32>
    %91 = tpu.matmul %90, %76, %cst_39 {dimension_numbers = #tpu.dot_dimension_numbers<[1], [0], [0], [1], [0, 0, 1, 1], [], []>} : vector<8x8xf32>, vector<8x8xf32>, vector<8x8xf32> -> vector<8x8xf32>
    %92 = tpu.concatenate %37, %55, %73, %91 in 1 : vector<8x8xf32>, vector<8x8xf32>, vector<8x8xf32>, vector<8x8xf32> -> vector<8x32xf32>
    %c0_40 = arith.constant 0 : index
    %c0_41 = arith.constant 0 : index
    %93 = vector.load %arg8[%c0_40, %c0_41] : memref<32x32xf32, #tpu.memory_space<vmem>>, vector<32x32xf32>
    %cst_42 = arith.constant dense<0.000000e+00> : vector<8x32xf32>
    %94 = tpu.matmul %92, %93, %cst_42 {dimension_numbers = #tpu.dot_dimension_numbers<[1], [0], [0], [1], [0, 0, 1, 1], [], []>} : vector<8x32xf32>, vector<32x32xf32>, vector<8x32xf32> -> vector<8x32xf32>
    %c0_43 = arith.constant 0 : index
    %c0_44 = arith.constant 0 : index
    %95 = vector.load %arg9[%c0_43, %c0_44] : memref<1x32xf32, #tpu.memory_space<vmem>>, vector<1x32xf32>
    %96 = vector.broadcast %95 : vector<1x32xf32> to vector<8x32xf32>
    %97 = arith.addf %94, %96 : vector<8x32xf32>
    %c0_45 = arith.constant 0 : index
    %c0_46 = arith.constant 0 : index
    %c0_47 = arith.constant 0 : index
    %98 = vector.load %arg10[%c0_45, %c0_46, %c0_47] : memref<1x8x32xf32, #tpu.memory_space<vmem>>, vector<1x8x32xf32>
    %99 = vector.shape_cast %98 : vector<1x8x32xf32> to vector<8x32xf32>
    %100 = vector.shape_cast %97 : vector<8x32xf32> to vector<1x8x32xf32>
    tpu.vector_store %arg10[%c0_45, %c0_46, %c0_47], %100 {strides = array<i32>} : memref<1x8x32xf32, #tpu.memory_space<vmem>>, vector<1x8x32xf32>,
    return
  }
  func.func @transform_0(%arg0: i32) -> (i32, i32, i32) {
    %c0_i32 = arith.constant 0 : i32
    %c0_i32_0 = arith.constant 0 : i32
    %c0_i32_1 = arith.constant 0 : i32
    return %arg0, %c0_i32, %c0_i32_0 : i32, i32, i32
  }
  func.func @transform_1(%arg0: i32) -> (i32, i32) {
    %c0_i32 = arith.constant 0 : i32
    %c0_i32_0 = arith.constant 0 : i32
    %c0_i32_1 = arith.constant 0 : i32
    return %c0_i32, %c0_i32_0 : i32, i32
  }
  func.func @transform_2(%arg0: i32) -> (i32, i32) {
    %c0_i32 = arith.constant 0 : i32
    %c0_i32_0 = arith.constant 0 : i32
    %c0_i32_1 = arith.constant 0 : i32
    return %c0_i32, %c0_i32_0 : i32, i32
  }
  func.func @transform_3(%arg0: i32) -> (i32, i32) {
    %c0_i32 = arith.constant 0 : i32
    %c0_i32_0 = arith.constant 0 : i32
    %c0_i32_1 = arith.constant 0 : i32
    return %c0_i32, %c0_i32_0 : i32, i32
  }
  func.func @transform_4(%arg0: i32) -> (i32, i32) {
    %c0_i32 = arith.constant 0 : i32
    %c0_i32_0 = arith.constant 0 : i32
    %c0_i32_1 = arith.constant 0 : i32
    return %c0_i32, %c0_i32_0 : i32, i32
  }
  func.func @transform_5(%arg0: i32) -> (i32, i32) {
    %c0_i32 = arith.constant 0 : i32
    %c0_i32_0 = arith.constant 0 : i32
    %c0_i32_1 = arith.constant 0 : i32
    return %c0_i32, %c0_i32_0 : i32, i32
  }
  func.func @transform_6(%arg0: i32) -> (i32, i32) {
    %c0_i32 = arith.constant 0 : i32
    %c0_i32_0 = arith.constant 0 : i32
    %c0_i32_1 = arith.constant 0 : i32
    return %c0_i32, %c0_i32_0 : i32, i32
  }
  func.func @transform_7(%arg0: i32) -> (i32, i32) {
    %c0_i32 = arith.constant 0 : i32
    %c0_i32_0 = arith.constant 0 : i32
    %c0_i32_1 = arith.constant 0 : i32
    return %c0_i32, %c0_i32_0 : i32, i32
  }
  func.func @transform_8(%arg0: i32) -> (i32, i32) {
    %c0_i32 = arith.constant 0 : i32
    %c0_i32_0 = arith.constant 0 : i32
    %c0_i32_1 = arith.constant 0 : i32
    return %c0_i32, %c0_i32_0 : i32, i32
  }
  func.func @transform_9(%arg0: i32) -> (i32, i32, i32) {
    %c0_i32 = arith.constant 0 : i32
    %c0_i32_0 = arith.constant 0 : i32
    %c0_i32_1 = arith.constant 0 : i32
    return %arg0, %c0_i32, %c0_i32_0 : i32, i32, i32
  }
}

</mosaic_0001>

<llo_original>
// kernel: tpu_custom_call.1
$region0: #{tpu_custom_call.1}
  #allocation0 [shape = 'u32[]', space=smem, size = 0x4, offset = 0x4, fixed_abs, tag = 'smem constant byte address 0x4 - core index']
  #allocation1 [shape = 'u32[144,128]{1,0:T(1,128)}', space=vmem, size = 0x12000, scoped, tag = 'internal scratch']
  %s0 = inlined_call_operand.hbm [shape: f32[2,8,32], index: 0, kind: input, shape index: {}]
  %s1 = inlined_call_operand.hbm [shape: f32[32,32], index: 1, kind: input, shape index: {}]
  %s2 = inlined_call_operand.hbm [shape: f32[32,32], index: 2, kind: input, shape index: {}]
  %s3 = inlined_call_operand.hbm [shape: f32[32,32], index: 3, kind: input, shape index: {}]
  %s4 = inlined_call_operand.vmem [shape: f32[1,32], index: 4, kind: input, shape index: {}]
  %s5 = inlined_call_operand.vmem [shape: f32[1,32], index: 5, kind: input, shape index: {}]
  %s6 = inlined_call_operand.vmem [shape: f32[1,32], index: 6, kind: input, shape index: {}]
  %s7 = inlined_call_operand.hbm [shape: f32[32,32], index: 7, kind: input, shape index: {}]
  %s8 = inlined_call_operand.vmem [shape: f32[1,32], index: 8, kind: input, shape index: {}]
  %s9 = inlined_call_operand.hbm [shape: f32[2,8,32], index: 9, kind: output, shape index: {}]
  %s10 = sld [smem:[#allocation0]]
  $region89: #{tpu_custom_call.1} parent=0
    _
  %s12 = ssub.s32 1, %s10
  %s13 = scalar_select 0, %s12, %s10
  $region1: #{tpu_custom_call.1} parent=0
    #allocation2 [shape = 'u8[8192]{0}', space=vmem, size = 0x2000, scoped, tag = 'input window, operand 0']
    #allocation3 [shape = 's32[2]{0}', space=sflag, size = 0x8, scoped, tag = 'scoped memory for tpu_custom_call.1']
    #allocation4 [shape = 's32[2]{0}', space=sflag, size = 0x8, scoped, tag = 'scoped memory for tpu_custom_call.1']
    #allocation5 [shape = 'u8[16384]{0}', space=vmem, size = 0x4000, scoped, tag = 'input window, operand 1, single buffered']
    #allocation6 [shape = 's32[1]{0}', space=sflag, size = 0x4, scoped, tag = 'scoped memory for tpu_custom_call.1']
    #allocation7 [shape = 'u8[16384]{0}', space=vmem, size = 0x4000, scoped, tag = 'input window, operand 2, single buffered']
    #allocation8 [shape = 'u8[16384]{0}', space=vmem, size = 0x4000, scoped, tag = 'input window, operand 3, single buffered']
    #allocation9 [shape = 's32[1]{0}', space=sflag, size = 0x4, scoped, tag = 'scoped memory for tpu_custom_call.1']
    #allocation10 [shape = 'u8[16384]{0}', space=vmem, size = 0x4000, scoped, tag = 'input window, operand 7, single buffered']
    #allocation11 [shape = 'u8[8192]{0}', space=vmem, size = 0x2000, scoped, tag = 'output window, operand 0']
    %14 = vsyncpa [#allocation3], 0
    %s15 = scalar_lea.sflag [#allocation3], 1
    %16 = vsyncpa %s15, 0
    %17 = vsyncpa [#allocation6], 0
    %18 = vsyncpa [#allocation9], 0
    %19 = vsyncpa [#allocation4], 0
    %s20 = scalar_lea.sflag [#allocation4], 1
    %21 = vsyncpa %s20, 0
    loop: start=0, step=1, limit=4
    $region2: #{tpu_custom_call.1} parent=1 // loop_pre_header
      _
    $region3: #{tpu_custom_call.1} parent=1 // loop_header
      %s23 = sphi 0, %s27
      %p24 = scmp.ge.s32.totalorder %s23, 4
      %s33 = sphi 0, %s35
      %s36 = sphi 0, %s33
      %s37 = sphi 0, %s36
      %s53 = sphi 0, %s37
      %s57 = sphi 0, %s57
      %s59 = sphi 0, %s57
      %s60 = sphi 0, %s59
      %s74 = sphi 0, %s60
      %s78 = sphi 0, %s78
      %s80 = sphi 0, %s78
      %s81 = sphi 0, %s80
      %s95 = sphi 0, %s81
      %s99 = sphi 0, %s99
      %s101 = sphi 0, %s99
      %s102 = sphi 0, %s101
      %s116 = sphi 0, %s102
      %s120 = sphi 0, %s120
      %s122 = sphi 0, %s120
      %s123 = sphi 0, %s122
      %s137 = sphi 0, %s123
      %s141 = sphi 0, %s141
      %s143 = sphi 0, %s141
      %s144 = sphi 0, %s143
      %s158 = sphi 0, %s144
      %s162 = sphi 0, %s162
      %s164 = sphi 0, %s162
      %s165 = sphi 0, %s164
      %s179 = sphi 0, %s165
      %s183 = sphi 0, %s183
      %s185 = sphi 0, %s183
      %s186 = sphi 0, %s185
      %s200 = sphi 0, %s186
      %s204 = sphi 0, %s204
      %s206 = sphi 0, %s204
      %s207 = sphi 0, %s206
      %s221 = sphi 0, %s207
      %s227 = sphi 0, %s229
      %s230 = sphi 0, %s227
      %s231 = sphi 0, %s230
      %s247 = sphi 0, %s231
    $region4: #{tpu_custom_call.1} parent=1 // loop_header_branch
      %26 = sbr.rel (%p24) target = $region8
    $region5: #{tpu_custom_call.1} parent=1 // loop_body
      %s28 = ssub.s32 %s23, 1
      %s29 = ssub.s32 %s23, 2
      %s30 = sadd.s32 %s23, 1
      %s31 = ssub.s32 %s23, %s30
      %p32 = scmp.eq.s32.totalorder %s31, 0
      %s34 = sadd.s32 %s33, 1
      %s35 = scalar_select %p32, %s33, %s34
      %p38 = pneg %p32
      %p39 = scmp.eq.s32.totalorder %s23, 1
      %p40 = por %p38, %p39
      %p41 = scmp.ne.s32.totalorder %s33, %s36
      %p42 = scmp.eq.s32.totalorder %s23, 0
      %p43 = por %p41, %p42
      %p44 = scmp.ne.s32.totalorder %s33, %s36
      %p45 = scmp.eq.s32.totalorder %s28, 1
      %p46 = por %p44, %p45
      %p47 = scmp.ne.s32.totalorder %s36, %s37
      %p48 = scmp.eq.s32.totalorder %s28, 0
      %p49 = por %p47, %p48
      %p50 = scmp.ne.s32.totalorder %s36, %s37
      %p51 = scmp.eq.s32.totalorder %s29, 1
      %p52 = por %p50, %p51
      %p54 = scmp.ne.s32.totalorder %s37, %s53
      %p55 = scmp.eq.s32.totalorder %s29, 0
      %p56 = por %p54, %p55
      %s58 = sadd.s32 %s57, 1
      %p61 = scmp.eq.s32.totalorder %s23, 1
      %p62 = scmp.ne.s32.totalorder %s57, %s59
      %p63 = scmp.eq.s32.totalorder %s23, 0
      %p64 = por %p62, %p63
      %p65 = scmp.ne.s32.totalorder %s57, %s59
      %p66 = scmp.eq.s32.totalorder %s28, 1
      %p67 = por %p65, %p66
      %p68 = scmp.ne.s32.totalorder %s59, %s60
      %p69 = scmp.eq.s32.totalorder %s28, 0
      %p70 = por %p68, %p69
      %p71 = scmp.ne.s32.totalorder %s59, %s60
      %p72 = scmp.eq.s32.totalorder %s29, 1
      %p73 = por %p71, %p72
      %p75 = scmp.ne.s32.totalorder %s60, %s74
      %p76 = scmp.eq.s32.totalorder %s29, 0
      %p77 = por %p75, %p76
      %s79 = sadd.s32 %s78, 1
      %p82 = scmp.eq.s32.totalorder %s23, 1
      %p83 = scmp.ne.s32.totalorder %s78, %s80
      %p84 = scmp.eq.s32.totalorder %s23, 0
      %p85 = por %p83, %p84
      %p86 = scmp.ne.s32.totalorder %s78, %s80
      %p87 = scmp.eq.s32.totalorder %s28, 1
      %p88 = por %p86, %p87
      %p89 = scmp.ne.s32.totalorder %s80, %s81
      %p90 = scmp.eq.s32.totalorder %s28, 0
      %p91 = por %p89, %p90
      %p92 = scmp.ne.s32.totalorder %s80, %s81
      %p93 = scmp.eq.s32.totalorder %s29, 1
      %p94 = por %p92, %p93
      %p96 = scmp.ne.s32.totalorder %s81, %s95
      %p97 = scmp.eq.s32.totalorder %s29, 0
      %p98 = por %p96, %p97
      %s100 = sadd.s32 %s99, 1
      %p103 = scmp.eq.s32.totalorder %s23, 1
      %p104 = scmp.ne.s32.totalorder %s99, %s101
      %p105 = scmp.eq.s32.totalorder %s23, 0
      %p106 = por %p104, %p105
      %p107 = scmp.ne.s32.totalorder %s99, %s101
      %p108 = scmp.eq.s32.totalorder %s28, 1
      %p109 = por %p107, %p108
      %p110 = scmp.ne.s32.totalorder %s101, %s102
      %p111 = scmp.eq.s32.totalorder %s28, 0
      %p112 = por %p110, %p111
      %p113 = scmp.ne.s32.totalorder %s101, %s102
      %p114 = scmp.eq.s32.totalorder %s29, 1
      %p115 = por %p113, %p114
      %p117 = scmp.ne.s32.totalorder %s102, %s116
      %p118 = scmp.eq.s32.totalorder %s29, 0
      %p119 = por %p117, %p118
      %s121 = sadd.s32 %s120, 1
      %p124 = scmp.eq.s32.totalorder %s23, 1
      %p125 = scmp.ne.s32.totalorder %s120, %s122
      %p126 = scmp.eq.s32.totalorder %s23, 0
      %p127 = por %p125, %p126
      %p128 = scmp.ne.s32.totalorder %s120, %s122
      %p129 = scmp.eq.s32.totalorder %s28, 1
      %p130 = por %p128, %p129
      %p131 = scmp.ne.s32.totalorder %s122, %s123
      %p132 = scmp.eq.s32.totalorder %s28, 0
      %p133 = por %p131, %p132
      %p134 = scmp.ne.s32.totalorder %s122, %s123
      %p135 = scmp.eq.s32.totalorder %s29, 1
      %p136 = por %p134, %p135
      %p138 = scmp.ne.s32.totalorder %s123, %s137
      %p139 = scmp.eq.s32.totalorder %s29, 0
      %p140 = por %p138, %p139
      %s142 = sadd.s32 %s141, 1
      %p145 = scmp.eq.s32.totalorder %s23, 1
      %p146 = scmp.ne.s32.totalorder %s141, %s143
      %p147 = scmp.eq.s32.totalorder %s23, 0
      %p148 = por %p146, %p147
      %p149 = scmp.ne.s32.totalorder %s141, %s143
      %p150 = scmp.eq.s32.totalorder %s28, 1
      %p151 = por %p149, %p150
      %p152 = scmp.ne.s32.totalorder %s143, %s144
      %p153 = scmp.eq.s32.totalorder %s28, 0
      %p154 = por %p152, %p153
      %p155 = scmp.ne.s32.totalorder %s143, %s144
      %p156 = scmp.eq.s32.totalorder %s29, 1
      %p157 = por %p155, %p156
      %p159 = scmp.ne.s32.totalorder %s144, %s158
      %p160 = scmp.eq.s32.totalorder %s29, 0
      %p161 = por %p159, %p160
      %s163 = sadd.s32 %s162, 1
      %p166 = scmp.eq.s32.totalorder %s23, 1
      %p167 = scmp.ne.s32.totalorder %s162, %s164
      %p168 = scmp.eq.s32.totalorder %s23, 0
      %p169 = por %p167, %p168
      %p170 = scmp.ne.s32.totalorder %s162, %s164
      %p171 = scmp.eq.s32.totalorder %s28, 1
      %p172 = por %p170, %p171
      %p173 = scmp.ne.s32.totalorder %s164, %s165
      %p174 = scmp.eq.s32.totalorder %s28, 0
      %p175 = por %p173, %p174
      %p176 = scmp.ne.s32.totalorder %s164, %s165
      %p177 = scmp.eq.s32.totalorder %s29, 1
      %p178 = por %p176, %p177
      %p180 = scmp.ne.s32.totalorder %s165, %s179
      %p181 = scmp.eq.s32.totalorder %s29, 0
      %p182 = por %p180, %p181
      %s184 = sadd.s32 %s183, 1
      %p187 = scmp.eq.s32.totalorder %s23, 1
      %p188 = scmp.ne.s32.totalorder %s183, %s185
      %p189 = scmp.eq.s32.totalorder %s23, 0
      %p190 = por %p188, %p189
      %p191 = scmp.ne.s32.totalorder %s183, %s185
      %p192 = scmp.eq.s32.totalorder %s28, 1
      %p193 = por %p191, %p192
      %p194 = scmp.ne.s32.totalorder %s185, %s186
      %p195 = scmp.eq.s32.totalorder %s28, 0
      %p196 = por %p194, %p195
      %p197 = scmp.ne.s32.totalorder %s185, %s186
      %p198 = scmp.eq.s32.totalorder %s29, 1
      %p199 = por %p197, %p198
      %p201 = scmp.ne.s32.totalorder %s186, %s200
      %p202 = scmp.eq.s32.totalorder %s29, 0
      %p203 = por %p201, %p202
      %s205 = sadd.s32 %s204, 1
      %p208 = scmp.eq.s32.totalorder %s23, 1
      %p209 = scmp.ne.s32.totalorder %s204, %s206
      %p210 = scmp.eq.s32.totalorder %s23, 0
      %p211 = por %p209, %p210
      %p212 = scmp.ne.s32.totalorder %s204, %s206
      %p213 = scmp.eq.s32.totalorder %s28, 1
      %p214 = por %p212, %p213
      %p215 = scmp.ne.s32.totalorder %s206, %s207
      %p216 = scmp.eq.s32.totalorder %s28, 0
      %p217 = por %p215, %p216
      %p218 = scmp.ne.s32.totalorder %s206, %s207
      %p219 = scmp.eq.s32.totalorder %s29, 1
      %p220 = por %p218, %p219
      %p222 = scmp.ne.s32.totalorder %s207, %s221
      %p223 = scmp.eq.s32.totalorder %s29, 0
      %p224 = por %p222, %p223
      %s225 = ssub.s32 %s23, %s30
      %p226 = scmp.eq.s32.totalorder %s225, 0
      %s228 = sadd.s32 %s227, 1
      %s229 = scalar_select %p226, %s227, %s228
      %p232 = pneg %p226
      %p233 = scmp.eq.s32.totalorder %s23, 1
      %p234 = por %p232, %p233
      %p235 = scmp.ne.s32.totalorder %s227, %s230
      %p236 = scmp.eq.s32.totalorder %s23, 0
      %p237 = por %p235, %p236
      %p238 = scmp.ne.s32.totalorder %s227, %s230
      %p239 = scmp.eq.s32.totalorder %s28, 1
      %p240 = por %p238, %p239
      %p241 = scmp.ne.s32.totalorder %s230, %s231
      %p242 = scmp.eq.s32.totalorder %s28, 0
      %p243 = por %p241, %p242
      %p244 = scmp.ne.s32.totalorder %s230, %s231
      %p245 = scmp.eq.s32.totalorder %s29, 1
      %p246 = por %p244, %p245
      %p248 = scmp.ne.s32.totalorder %s231, %s247
      %p249 = scmp.eq.s32.totalorder %s29, 0
      %p250 = por %p248, %p249
      %p251 = scmp.le.s32.totalorder 1, %s23
      %p252 = scmp.lt.s32.totalorder %s23, 3
      %p253 = pnand %p251, %p252
      %p254 = pneg %p253
      // Predicated region
      $region9: #{tpu_custom_call.1} parent=5 // pred_check
        _
      $region10: #{tpu_custom_call.1} parent=5 // pred_check_branch
        %256 = sbr.rel (%p253) target = $region12
      $region11: #{tpu_custom_call.1} parent=5 // pred_region
        %s257 = ssub.s32 %s23, 1
        // Predicated region
        $region13: #{tpu_custom_call.1} parent=11 // pred_check
          %p258 = pneg %p70
        $region14: #{tpu_custom_call.1} parent=11 // pred_check_branch
          %260 = sbr.rel (%p258) target = $region16
        $region15: #{tpu_custom_call.1} parent=11 // pred_region
          %s262 = ssub.s32 512, 512
          %263 = vsyncadd [#allocation6], %s262
          %s264 = sshll.u32 [#allocation5], 4
          %s265 = int_to_ptr.vmem [resolvable:$true] %s264
          %270 = dma.hbm_to_vmem [thread:$0]  %s1, 512, %s265, [#allocation6], 128, 128, 8
        $region16: #{tpu_custom_call.1} parent=11 // pred_fallthru
          _
        // Predicated region
        $region17: #{tpu_custom_call.1} parent=11 // pred_check
          %p271 = pneg %p91
        $region18: #{tpu_custom_call.1} parent=11 // pred_check_branch
          %273 = sbr.rel (%p271) target = $region20
        $region19: #{tpu_custom_call.1} parent=11 // pred_region
          %s275 = ssub.s32 512, 512
          %276 = vsyncadd [#allocation6], %s275
          %s277 = sshll.u32 [#allocation7], 4
          %s278 = int_to_ptr.vmem [resolvable:$true] %s277
          %283 = dma.hbm_to_vmem [thread:$0]  %s2, 512, %s278, [#allocation6], 128, 128, 8
        $region20: #{tpu_custom_call.1} parent=11 // pred_fallthru
          _
        // Predicated region
        $region21: #{tpu_custom_call.1} parent=11 // pred_check
          %p284 = pneg %p112
        $region22: #{tpu_custom_call.1} parent=11 // pred_check_branch
          %286 = sbr.rel (%p284) target = $region24
        $region23: #{tpu_custom_call.1} parent=11 // pred_region
          %s288 = ssub.s32 512, 512
          %289 = vsyncadd [#allocation9], %s288
          %s290 = sshll.u32 [#allocation8], 4
          %s291 = int_to_ptr.vmem [resolvable:$true] %s290
          %296 = dma.hbm_to_vmem [thread:$0]  %s3, 512, %s291, [#allocation9], 128, 128, 8
        $region24: #{tpu_custom_call.1} parent=11 // pred_fallthru
          _
        // Predicated region
        $region25: #{tpu_custom_call.1} parent=11 // pred_check
          %p297 = pneg %p133
        $region26: #{tpu_custom_call.1} parent=11 // pred_check_branch
          %299 = sbr.rel (%p297) target = $region28
        $region27: #{tpu_custom_call.1} parent=11 // pred_region
          _
        $region28: #{tpu_custom_call.1} parent=11 // pred_fallthru
          _
        // Predicated region
        $region29: #{tpu_custom_call.1} parent=11 // pred_check
          %p300 = pneg %p154
        $region30: #{tpu_custom_call.1} parent=11 // pred_check_branch
          %302 = sbr.rel (%p300) target = $region32
        $region31: #{tpu_custom_call.1} parent=11 // pred_region
          _
        $region32: #{tpu_custom_call.1} parent=11 // pred_fallthru
          _
        // Predicated region
        $region33: #{tpu_custom_call.1} parent=11 // pred_check
          %p303 = pneg %p175
        $region34: #{tpu_custom_call.1} parent=11 // pred_check_branch
          %305 = sbr.rel (%p303) target = $region36
        $region35: #{tpu_custom_call.1} parent=11 // pred_region
          _
        $region36: #{tpu_custom_call.1} parent=11 // pred_fallthru
          _
        // Predicated region
        $region37: #{tpu_custom_call.1} parent=11 // pred_check
          %p306 = pneg %p196
        $region38: #{tpu_custom_call.1} parent=11 // pred_check_branch
          %308 = sbr.rel (%p306) target = $region40
        $region39: #{tpu_custom_call.1} parent=11 // pred_region
          %s310 = ssub.s32 512, 512
          %311 = vsyncadd [#allocation9], %s310
          %s312 = sshll.u32 [#allocation10], 4
          %s313 = int_to_ptr.vmem [resolvable:$true] %s312
          %318 = dma.hbm_to_vmem [thread:$0]  %s7, 512, %s313, [#allocation9], 128, 128, 8
        $region40: #{tpu_custom_call.1} parent=11 // pred_fallthru
          _
        // Predicated region
        $region41: #{tpu_custom_call.1} parent=11 // pred_check
          %p319 = pneg %p217
        $region42: #{tpu_custom_call.1} parent=11 // pred_check_branch
          %321 = sbr.rel (%p319) target = $region44
        $region43: #{tpu_custom_call.1} parent=11 // pred_region
          _
        $region44: #{tpu_custom_call.1} parent=11 // pred_fallthru
          _
      $region12: #{tpu_custom_call.1} parent=5 // pred_fallthru
        _
      %p322 = scmp.lt.s32.totalorder %s23, 2
      // Predicated region
      $region45: #{tpu_custom_call.1} parent=5 // pred_check
        %p323 = pneg %p322
      $region46: #{tpu_custom_call.1} parent=5 // pred_check_branch
        %325 = sbr.rel (%p323) target = $region48
      $region47: #{tpu_custom_call.1} parent=5 // pred_region
        // Predicated region
        $region49: #{tpu_custom_call.1} parent=47 // pred_check
          %p326 = pneg %p43
        $region50: #{tpu_custom_call.1} parent=47 // pred_check_branch
          %328 = sbr.rel (%p326) target = $region52
        $region51: #{tpu_custom_call.1} parent=47 // pred_region
          %s329 = sand.u32 %s33, 1
          %s330 = scalar_lea.sflag [#allocation3], %s329
          %s331 = sand.u32 %s33, 1
          %s332 = smul.addr %s331, 8
          %s333 = scalar_lea.vmem [#allocation2], %s332
          %s335 = ssub.s32 128, 128
          %336 = vsyncadd %s330, %s335
          %s337 = smul.addr %s23, 128
          %s338 = scalar_lea.hbm %s0, %s337
          %s340 = sshll.u32 %s333, 4
          %s341 = int_to_ptr.vmem [resolvable:$true] %s340
          %343 = dma.hbm_to_vmem [thread:$0]  %s338, 128, %s341, %s330
        $region52: #{tpu_custom_call.1} parent=47 // pred_fallthru
          _
      $region48: #{tpu_custom_call.1} parent=5 // pred_fallthru
        _
      %p344 = scmp.le.s32.totalorder 1, %s23
      %p345 = scmp.lt.s32.totalorder %s23, 3
      %p346 = pnand %p344, %p345
      %p347 = pneg %p346
      // Predicated region
      $region53: #{tpu_custom_call.1} parent=5 // pred_check
        _
      $region54: #{tpu_custom_call.1} parent=5 // pred_check_branch
        %349 = sbr.rel (%p346) target = $region56
      $region55: #{tpu_custom_call.1} parent=5 // pred_region
        %s350 = ssub.s32 %s23, 1
        %s351 = sand.u32 %s36, 1
        %s352 = scalar_lea.sflag [#allocation3], %s351
        %s353 = sand.u32 %s36, 1
        %s354 = smul.addr %s353, 8
        %s355 = scalar_lea.vmem [#allocation2], %s354
        // Predicated region
        $region57: #{tpu_custom_call.1} parent=55 // pred_check
          %p356 = pneg %p49
        $region58: #{tpu_custom_call.1} parent=55 // pred_check_branch
          %358 = sbr.rel (%p356) target = $region60
        $region59: #{tpu_custom_call.1} parent=55 // pred_region
          %359 = dma.done %s352, 128
        $region60: #{tpu_custom_call.1} parent=55 // pred_fallthru
          _
        // Predicated region
        $region61: #{tpu_custom_call.1} parent=55 // pred_check
          %p360 = pneg %p70
        $region62: #{tpu_custom_call.1} parent=55 // pred_check_branch
          %362 = sbr.rel (%p360) target = $region64
        $region63: #{tpu_custom_call.1} parent=55 // pred_region
          %363 = dma.done [#allocation6], 512
        $region64: #{tpu_custom_call.1} parent=55 // pred_fallthru
          _
        // Predicated region
        $region65: #{tpu_custom_call.1} parent=55 // pred_check
          %p364 = pneg %p91
        $region66: #{tpu_custom_call.1} parent=55 // pred_check_branch
          %366 = sbr.rel (%p364) target = $region68
        $region67: #{tpu_custom_call.1} parent=55 // pred_region
          %367 = dma.done [#allocation6], 512
        $region68: #{tpu_custom_call.1} parent=55 // pred_fallthru
          _
        // Predicated region
        $region69: #{tpu_custom_call.1} parent=55 // pred_check
          %p368 = pneg %p112
        $region70: #{tpu_custom_call.1} parent=55 // pred_check_branch
          %370 = sbr.rel (%p368) target = $region72
        $region71: #{tpu_custom_call.1} parent=55 // pred_region
          %371 = dma.done [#allocation9], 512
        $region72: #{tpu_custom_call.1} parent=55 // pred_fallthru
          _
        // Predicated region
        $region73: #{tpu_custom_call.1} parent=55 // pred_check
          %p372 = pneg %p196
        $region74: #{tpu_custom_call.1} parent=55 // pred_check_branch
          %374 = sbr.rel (%p372) target = $region76
        $region75: #{tpu_custom_call.1} parent=55 // pred_region
          %375 = dma.done [#allocation9], 512
        $region76: #{tpu_custom_call.1} parent=55 // pred_fallthru
          _
        %s376 = sand.u32 %s36, 1
        %s377 = scalar_lea.sflag [#allocation3], %s376
        %s378 = sand.u32 %s36, 1
        %s379 = smul.addr %s378, 8
        %s380 = scalar_lea.vmem [#allocation2], %s379
        %p381 = pneg %p49
        %p382 = pneg %p46
        %p383 = pneg %p70
        %p384 = pneg %p67
        %p385 = pneg %p91
        %p386 = pneg %p88
        %p387 = pneg %p112
        %p388 = pneg %p109
        %p389 = pneg %p133
        %p390 = pneg %p130
        %p391 = pneg %p154
        %p392 = pneg %p151
        %p393 = pneg %p175
        %p394 = pneg %p172
        %p395 = pneg %p196
        %p396 = pneg %p193
        %p397 = pneg %p217
        %p398 = pneg %p214
        %p399 = pneg %p243
        %p400 = pneg %p240
        %s401 = sand.u32 %s230, 1
        %s402 = scalar_lea.sflag [#allocation4], %s401
        %s403 = sand.u32 %s230, 1
        %s404 = smul.addr %s403, 8
        %s405 = scalar_lea.vmem [#allocation11], %s404
        %v406 = vld [vmem:[%s355] sm:$0xff]
        %v407 = vld [vmem:[#allocation5] sm:$0xff]
        %v408 = vld [vmem:[#allocation5 + $0x8] sm:$0xff]
        %v409 = vld [vmem:[#allocation5 + $0x10] sm:$0xff]
        %v410 = vld [vmem:[#allocation5 + $0x18] sm:$0xff]
        %v411 = vld [vmem:[%s4] sm:$0x1]
        %v413 = vlaneseq
        %v414 = vshrl.u32 %v413, 7
        %v415 = vsub.s32 0, %v414
        %v416 = vrot.slane %v411, %v415
        %vm418 = vcmask 261120
        %v420 = vsel %vm418, %v406, 0
        %422 = vmatprep.subr.mxu0 0.0
        %423 = vmatpush1.msra.mxu0 0.0
        %424 = vmatprep.subr.mxu0 0.0
        %425 = vmatpush1.msra.mxu0 0.0
        %426 = vmatprep.subr.mxu0 0.0
        %427 = vmatpush1.msra.mxu0 0.0
        %428 = vmatprep.subr.mxu0 0.0
        %429 = vmatpush1.msra.mxu0 0.0
        %430 = vmatprep.subr.mxu0 0.0
        %431 = vmatpush1.msra.mxu0 0.0
        %432 = vmatprep.subr.mxu0 0.0
        %433 = vmatpush1.msra.mxu0 0.0
        %434 = vmatprep.subr.mxu0 0.0
        %435 = vmatpush1.msra.mxu0 0.0
        %436 = vmatprep.subr.mxu0 0.0
        %437 = vmatpush1.msra.mxu0 0.0
        %438 = vmatprep.subr.mxu0 0.0
        %439 = vmatpush1.msra.mxu0 0.0
        %440 = vmatprep.subr.mxu0 0.0
        %441 = vmatpush1.msra.mxu0 0.0
        %442 = vmatprep.subr.mxu0 0.0
        %443 = vmatpush1.msra.mxu0 0.0
        %444 = vmatprep.subr.mxu0 0.0
        %445 = vmatpush1.msra.mxu0 0.0
        %446 = vmatprep.subr.mxu0 0.0
        %447 = vmatpush1.msra.mxu0 %v410
        %448 = vmatprep.subr.mxu0 0.0
        %449 = vmatpush1.msra.mxu0 %v409
        %450 = vmatprep.subr.mxu0 0.0
        %451 = vmatpush1.msra.mxu0 %v408
        %452 = vmatprep.subr.mxu0 0.0
        %453 = vmatpush1.msra.mxu0 %v407
        %454 = vmatprep.subr.mxu0 0.0
        %455 = vmatpush2.msra.mxu0 0.0
        %456 = vmatprep.subr.mxu0 0.0
        %457 = vmatpush2.msra.mxu0 0.0
        %458 = vmatprep.subr.mxu0 0.0
        %459 = vmatpush2.msra.mxu0 0.0
        %460 = vmatprep.subr.mxu0 0.0
        %461 = vmatpush2.msra.mxu0 0.0
        %462 = vmatprep.subr.mxu0 0.0
        %463 = vmatpush2.msra.mxu0 0.0
        %464 = vmatprep.subr.mxu0 0.0
        %465 = vmatpush2.msra.mxu0 0.0
        %466 = vmatprep.subr.mxu0 0.0
        %467 = vmatpush2.msra.mxu0 0.0
        %468 = vmatprep.subr.mxu0 0.0
        %469 = vmatpush2.msra.mxu0 0.0
        %470 = vmatprep.subr.mxu0 0.0
        %471 = vmatpush2.msra.mxu0 0.0
        %472 = vmatprep.subr.mxu0 0.0
        %473 = vmatpush2.msra.mxu0 0.0
        %474 = vmatprep.subr.mxu0 0.0
        %475 = vmatpush2.msra.mxu0 0.0
        %476 = vmatprep.subr.mxu0 0.0
        %477 = vmatpush2.msra.mxu0 0.0
        %478 = vmatprep.subr.mxu0 0.0
        %479 = vmatpush2.msra.mxu0 0.0
        %480 = vmatprep.subr.mxu0 0.0
        %481 = vmatpush2.msra.mxu0 0.0
        %482 = vmatprep.subr.mxu0 0.0
        %483 = vmatpush2.msra.mxu0 0.0
        %484 = vmatprep.subr.mxu0 0.0
        %485 = vmatpush2.msra.mxu0 0.0
        %486 = vmatprep.mubr.f32.mxu0 0.0
        %487 = vmatmul.mubr.f32.gmra.mxu0 %v420
        %v488 = vpop.f32.mrf.mxu0
        %v489 = vadd.f32 %v416, %v488
        %v490 = vpop.f32.mrf.mxu0
        %491 = vdwg.mxu0
        %v492 = vld [vmem:[#allocation7] sm:$0xff]
        %v493 = vld [vmem:[#allocation7 + $0x8] sm:$0xff]
        %v494 = vld [vmem:[#allocation7 + $0x10] sm:$0xff]
        %v495 = vld [vmem:[#allocation7 + $0x18] sm:$0xff]
        %v496 = vld [vmem:[%s5] sm:$0x1]
        %v498 = vlaneseq
        %v499 = vshrl.u32 %v498, 7
        %v500 = vsub.s32 0, %v499
        %v501 = vrot.slane %v496, %v500
        %503 = vmatprep.subr.mxu0 0.0
        %504 = vmatpush1.msra.mxu0 0.0
        %505 = vmatprep.subr.mxu0 0.0
        %506 = vmatpush1.msra.mxu0 0.0
        %507 = vmatprep.subr.mxu0 0.0
        %508 = vmatpush1.msra.mxu0 0.0
        %509 = vmatprep.subr.mxu0 0.0
        %510 = vmatpush1.msra.mxu0 0.0
        %511 = vmatprep.subr.mxu0 0.0
        %512 = vmatpush1.msra.mxu0 0.0
        %513 = vmatprep.subr.mxu0 0.0
        %514 = vmatpush1.msra.mxu0 0.0
        %515 = vmatprep.subr.mxu0 0.0
        %516 = vmatpush1.msra.mxu0 0.0
        %517 = vmatprep.subr.mxu0 0.0
        %518 = vmatpush1.msra.mxu0 0.0
        %519 = vmatprep.subr.mxu0 0.0
        %520 = vmatpush1.msra.mxu0 0.0
        %521 = vmatprep.subr.mxu0 0.0
        %522 = vmatpush1.msra.mxu0 0.0
        %523 = vmatprep.subr.mxu0 0.0
        %524 = vmatpush1.msra.mxu0 0.0
        %525 = vmatprep.subr.mxu0 0.0
        %526 = vmatpush1.msra.mxu0 0.0
        %527 = vmatprep.subr.mxu0 0.0
        %528 = vmatpush1.msra.mxu0 %v495
        %529 = vmatprep.subr.mxu0 0.0
        %530 = vmatpush1.msra.mxu0 %v494
        %531 = vmatprep.subr.mxu0 0.0
        %532 = vmatpush1.msra.mxu0 %v493
        %533 = vmatprep.subr.mxu0 0.0
        %534 = vmatpush1.msra.mxu0 %v492
        %535 = vmatprep.subr.mxu0 0.0
        %536 = vmatpush2.msra.mxu0 0.0
        %537 = vmatprep.subr.mxu0 0.0
        %538 = vmatpush2.msra.mxu0 0.0
        %539 = vmatprep.subr.mxu0 0.0
        %540 = vmatpush2.msra.mxu0 0.0
        %541 = vmatprep.subr.mxu0 0.0
        %542 = vmatpush2.msra.mxu0 0.0
        %543 = vmatprep.subr.mxu0 0.0
        %544 = vmatpush2.msra.mxu0 0.0
        %545 = vmatprep.subr.mxu0 0.0
        %546 = vmatpush2.msra.mxu0 0.0
        %547 = vmatprep.subr.mxu0 0.0
        %548 = vmatpush2.msra.mxu0 0.0
        %549 = vmatprep.subr.mxu0 0.0
        %550 = vmatpush2.msra.mxu0 0.0
        %551 = vmatprep.subr.mxu0 0.0
        %552 = vmatpush2.msra.mxu0 0.0
        %553 = vmatprep.subr.mxu0 0.0
        %554 = vmatpush2.msra.mxu0 0.0
        %555 = vmatprep.subr.mxu0 0.0
        %556 = vmatpush2.msra.mxu0 0.0
        %557 = vmatprep.subr.mxu0 0.0
        %558 = vmatpush2.msra.mxu0 0.0
        %559 = vmatprep.subr.mxu0 0.0
        %560 = vmatpush2.msra.mxu0 0.0
        %561 = vmatprep.subr.mxu0 0.0
        %562 = vmatpush2.msra.mxu0 0.0
        %563 = vmatprep.subr.mxu0 0.0
        %564 = vmatpush2.msra.mxu0 0.0
        %565 = vmatprep.subr.mxu0 0.0
        %566 = vmatpush2.msra.mxu0 0.0
        %567 = vmatprep.mubr.f32.mxu0 0.0
        %568 = vmatmul.mubr.f32.gmra.mxu0 %v420
        %v569 = vpop.f32.mrf.mxu0
        %v570 = vadd.f32 %v501, %v569
        %v571 = vpop.f32.mrf.mxu0
        %572 = vdwg.mxu0
        %v573 = vld [vmem:[#allocation8] sm:$0xff]
        %v574 = vld [vmem:[#allocation8 + $0x8] sm:$0xff]
        %v575 = vld [vmem:[#allocation8 + $0x10] sm:$0xff]
        %v576 = vld [vmem:[#allocation8 + $0x18] sm:$0xff]
        %v577 = vld [vmem:[%s6] sm:$0x1]
        %v579 = vlaneseq
        %v580 = vshrl.u32 %v579, 7
        %v581 = vsub.s32 0, %v580
        %v582 = vrot.slane %v577, %v581
        %584 = vmatprep.subr.mxu0 0.0
        %585 = vmatpush1.msra.mxu0 0.0
        %586 = vmatprep.subr.mxu0 0.0
        %587 = vmatpush1.msra.mxu0 0.0
        %588 = vmatprep.subr.mxu0 0.0
        %589 = vmatpush1.msra.mxu0 0.0
        %590 = vmatprep.subr.mxu0 0.0
        %591 = vmatpush1.msra.mxu0 0.0
        %592 = vmatprep.subr.mxu0 0.0
        %593 = vmatpush1.msra.mxu0 0.0
        %594 = vmatprep.subr.mxu0 0.0
        %595 = vmatpush1.msra.mxu0 0.0
        %596 = vmatprep.subr.mxu0 0.0
        %597 = vmatpush1.msra.mxu0 0.0
        %598 = vmatprep.subr.mxu0 0.0
        %599 = vmatpush1.msra.mxu0 0.0
        %600 = vmatprep.subr.mxu0 0.0
        %601 = vmatpush1.msra.mxu0 0.0
        %602 = vmatprep.subr.mxu0 0.0
        %603 = vmatpush1.msra.mxu0 0.0
        %604 = vmatprep.subr.mxu0 0.0
        %605 = vmatpush1.msra.mxu0 0.0
        %606 = vmatprep.subr.mxu0 0.0
        %607 = vmatpush1.msra.mxu0 0.0
        %608 = vmatprep.subr.mxu0 0.0
        %609 = vmatpush1.msra.mxu0 %v576
        %610 = vmatprep.subr.mxu0 0.0
        %611 = vmatpush1.msra.mxu0 %v575
        %612 = vmatprep.subr.mxu0 0.0
        %613 = vmatpush1.msra.mxu0 %v574
        %614 = vmatprep.subr.mxu0 0.0
        %615 = vmatpush1.msra.mxu0 %v573
        %616 = vmatprep.subr.mxu0 0.0
        %617 = vmatpush2.msra.mxu0 0.0
        %618 = vmatprep.subr.mxu0 0.0
        %619 = vmatpush2.msra.mxu0 0.0
        %620 = vmatprep.subr.mxu0 0.0
        %621 = vmatpush2.msra.mxu0 0.0
        %622 = vmatprep.subr.mxu0 0.0
        %623 = vmatpush2.msra.mxu0 0.0
        %624 = vmatprep.subr.mxu0 0.0
        %625 = vmatpush2.msra.mxu0 0.0
        %626 = vmatprep.subr.mxu0 0.0
        %627 = vmatpush2.msra.mxu0 0.0
        %628 = vmatprep.subr.mxu0 0.0
        %629 = vmatpush2.msra.mxu0 0.0
        %630 = vmatprep.subr.mxu0 0.0
        %631 = vmatpush2.msra.mxu0 0.0
        %632 = vmatprep.subr.mxu0 0.0
        %633 = vmatpush2.msra.mxu0 0.0
        %634 = vmatprep.subr.mxu0 0.0
        %635 = vmatpush2.msra.mxu0 0.0
        %636 = vmatprep.subr.mxu0 0.0
        %637 = vmatpush2.msra.mxu0 0.0
        %638 = vmatprep.subr.mxu0 0.0
        %639 = vmatpush2.msra.mxu0 0.0
        %640 = vmatprep.subr.mxu0 0.0
        %641 = vmatpush2.msra.mxu0 0.0
        %642 = vmatprep.subr.mxu0 0.0
        %643 = vmatpush2.msra.mxu0 0.0
        %644 = vmatprep.subr.mxu0 0.0
        %645 = vmatpush2.msra.mxu0 0.0
        %646 = vmatprep.subr.mxu0 0.0
        %647 = vmatpush2.msra.mxu0 0.0
        %648 = vmatprep.mubr.f32.mxu0 0.0
        %649 = vmatmul.mubr.f32.gmra.mxu0 %v420
        %v650 = vpop.f32.mrf.mxu0
        %v651 = vadd.f32 %v582, %v650
        %v652 = vpop.f32.mrf.mxu0
        %653 = vdwg.mxu0
        %v654 = vlaneseq
        %v655 = vshrl.u32 %v654, 7
        %v656 = vlaneseq
        %v657 = vand.u32 %v656, 127
        %vm658 = vcmp.le.s32.totalorder %v657, %v655
        %vm659 = vcmask 64512
        %v661 = vsel %vm659, %v489, 0
        %v664 = vsel %vm659, %v570, 0
        %666 = vmatprep.subr.mxu0 0.0
        %667 = vmatpush1.xpose.msra.mxu0 0.0
        %668 = vmatprep.subr.mxu0 0.0
        %669 = vmatpush1.xpose.msra.mxu0 0.0
        %670 = vmatprep.subr.mxu0 0.0
        %671 = vmatpush1.xpose.msra.mxu0 0.0
        %672 = vmatprep.subr.mxu0 0.0
        %673 = vmatpush1.xpose.msra.mxu0 0.0
        %674 = vmatprep.subr.mxu0 0.0
        %675 = vmatpush1.xpose.msra.mxu0 0.0
        %676 = vmatprep.subr.mxu0 0.0
        %677 = vmatpush1.xpose.msra.mxu0 0.0
        %678 = vmatprep.subr.mxu0 0.0
        %679 = vmatpush1.xpose.msra.mxu0 0.0
        %680 = vmatprep.subr.mxu0 0.0
        %681 = vmatpush1.xpose.msra.mxu0 0.0
        %682 = vmatprep.subr.mxu0 0.0
        %683 = vmatpush1.xpose.msra.mxu0 0.0
        %684 = vmatprep.subr.mxu0 0.0
        %685 = vmatpush1.xpose.msra.mxu0 0.0
        %686 = vmatprep.subr.mxu0 0.0
        %687 = vmatpush1.xpose.msra.mxu0 0.0
        %688 = vmatprep.subr.mxu0 0.0
        %689 = vmatpush1.xpose.msra.mxu0 0.0
        %690 = vmatprep.subr.mxu0 0.0
        %691 = vmatpush1.xpose.msra.mxu0 0.0
        %692 = vmatprep.subr.mxu0 0.0
        %693 = vmatpush1.xpose.msra.mxu0 0.0
        %694 = vmatprep.subr.mxu0 0.0
        %695 = vmatpush1.xpose.msra.mxu0 0.0
        %696 = vmatprep.subr.mxu0 0.0
        %697 = vmatpush1.xpose.msra.mxu0 %v664
        %698 = vmatprep.subr.mxu0 0.0
        %699 = vmatpush2.xpose.msra.mxu0 0.0
        %700 = vmatprep.subr.mxu0 0.0
        %701 = vmatpush2.xpose.msra.mxu0 0.0
        %702 = vmatprep.subr.mxu0 0.0
        %703 = vmatpush2.xpose.msra.mxu0 0.0
        %704 = vmatprep.subr.mxu0 0.0
        %705 = vmatpush2.xpose.msra.mxu0 0.0
        %706 = vmatprep.subr.mxu0 0.0
        %707 = vmatpush2.xpose.msra.mxu0 0.0
        %708 = vmatprep.subr.mxu0 0.0
        %709 = vmatpush2.xpose.msra.mxu0 0.0
        %710 = vmatprep.subr.mxu0 0.0
        %711 = vmatpush2.xpose.msra.mxu0 0.0
        %712 = vmatprep.subr.mxu0 0.0
        %713 = vmatpush2.xpose.msra.mxu0 0.0
        %714 = vmatprep.subr.mxu0 0.0
        %715 = vmatpush2.xpose.msra.mxu0 0.0
        %716 = vmatprep.subr.mxu0 0.0
        %717 = vmatpush2.xpose.msra.mxu0 0.0
        %718 = vmatprep.subr.mxu0 0.0
        %719 = vmatpush2.xpose.msra.mxu0 0.0
        %720 = vmatprep.subr.mxu0 0.0
        %721 = vmatpush2.xpose.msra.mxu0 0.0
        %722 = vmatprep.subr.mxu0 0.0
        %723 = vmatpush2.xpose.msra.mxu0 0.0
        %724 = vmatprep.subr.mxu0 0.0
        %725 = vmatpush2.xpose.msra.mxu0 0.0
        %726 = vmatprep.subr.mxu0 0.0
        %727 = vmatpush2.xpose.msra.mxu0 0.0
        %728 = vmatprep.subr.mxu0 0.0
        %729 = vmatpush2.xpose.msra.mxu0 0.0
        %730 = vmatprep.mubr.f32.mxu0 0.0
        %731 = vmatmul.mubr.f32.gmra.mxu0 %v661
        %v732 = vpop.f32.mrf.mxu0
        %v733 = vadd.f32 0.0, %v732
        %v734 = vpop.f32.mrf.mxu0
        %735 = vdwg.mxu0
        %v736 = vmul.f32 %v733, 0.35355338
        %v737 = vsel %vm658, %v736, -1e+09
        %v738 = vsel %vm659, %v737, -inf
        %739 = vmax.xlane.f32.xlu0 %v738
        %v740 = vpop.xlane.xlu0 %739
        %v741 = vsub.f32 %v737, %v740
        %v742 = vmul.f32 %v741, 1.442695
        %v743 = vpow.pop %v742
        %v744 = vsel %vm659, %v743, 0.0
        %745 = vadd.xlane.f32.xlu0 %v744
        %v746 = vpop.xlane.xlu0 %745
        %v747 = vrcp.pop %v746
        %v748 = vmul.f32 %v743, %v747
        %v750 = vsel %vm659, %v748, 0
        %752 = vmatprep.subr.mxu0 0.0
        %753 = vmatpush1.msra.mxu0 0.0
        %754 = vmatprep.subr.mxu0 0.0
        %755 = vmatpush1.msra.mxu0 0.0
        %756 = vmatprep.subr.mxu0 0.0
        %757 = vmatpush1.msra.mxu0 0.0
        %758 = vmatprep.subr.mxu0 0.0
        %759 = vmatpush1.msra.mxu0 0.0
        %760 = vmatprep.subr.mxu0 0.0
        %761 = vmatpush1.msra.mxu0 0.0
        %762 = vmatprep.subr.mxu0 0.0
        %763 = vmatpush1.msra.mxu0 0.0
        %764 = vmatprep.subr.mxu0 0.0
        %765 = vmatpush1.msra.mxu0 0.0
        %766 = vmatprep.subr.mxu0 0.0
        %767 = vmatpush1.msra.mxu0 0.0
        %768 = vmatprep.subr.mxu0 0.0
        %769 = vmatpush1.msra.mxu0 0.0
        %770 = vmatprep.subr.mxu0 0.0
        %771 = vmatpush1.msra.mxu0 0.0
        %772 = vmatprep.subr.mxu0 0.0
        %773 = vmatpush1.msra.mxu0 0.0
        %774 = vmatprep.subr.mxu0 0.0
        %775 = vmatpush1.msra.mxu0 0.0
        %776 = vmatprep.subr.mxu0 0.0
        %777 = vmatpush1.msra.mxu0 0.0
        %778 = vmatprep.subr.mxu0 0.0
        %779 = vmatpush1.msra.mxu0 0.0
        %780 = vmatprep.subr.mxu0 0.0
        %781 = vmatpush1.msra.mxu0 0.0
        %782 = vmatprep.subr.mxu0 0.0
        %783 = vmatpush1.msra.mxu0 %v651
        %784 = vmatprep.subr.mxu0 0.0
        %785 = vmatpush2.msra.mxu0 0.0
        %786 = vmatprep.subr.mxu0 0.0
        %787 = vmatpush2.msra.mxu0 0.0
        %788 = vmatprep.subr.mxu0 0.0
        %789 = vmatpush2.msra.mxu0 0.0
        %790 = vmatprep.subr.mxu0 0.0
        %791 = vmatpush2.msra.mxu0 0.0
        %792 = vmatprep.subr.mxu0 0.0
        %793 = vmatpush2.msra.mxu0 0.0
        %794 = vmatprep.subr.mxu0 0.0
        %795 = vmatpush2.msra.mxu0 0.0
        %796 = vmatprep.subr.mxu0 0.0
        %797 = vmatpush2.msra.mxu0 0.0
        %798 = vmatprep.subr.mxu0 0.0
        %799 = vmatpush2.msra.mxu0 0.0
        %800 = vmatprep.subr.mxu0 0.0
        %801 = vmatpush2.msra.mxu0 0.0
        %802 = vmatprep.subr.mxu0 0.0
        %803 = vmatpush2.msra.mxu0 0.0
        %804 = vmatprep.subr.mxu0 0.0
        %805 = vmatpush2.msra.mxu0 0.0
        %806 = vmatprep.subr.mxu0 0.0
        %807 = vmatpush2.msra.mxu0 0.0
        %808 = vmatprep.subr.mxu0 0.0
        %809 = vmatpush2.msra.mxu0 0.0
        %810 = vmatprep.subr.mxu0 0.0
        %811 = vmatpush2.msra.mxu0 0.0
        %812 = vmatprep.subr.mxu0 0.0
        %813 = vmatpush2.msra.mxu0 0.0
        %814 = vmatprep.subr.mxu0 0.0
        %815 = vmatpush2.msra.mxu0 0.0
        %816 = vmatprep.mubr.f32.mxu0 0.0
        %817 = vmatmul.mubr.f32.gmra.mxu0 %v750
        %v818 = vpop.f32.mrf.mxu0
        %v819 = vadd.f32 0.0, %v818
        %v820 = vpop.f32.mrf.mxu0
        %821 = vdwg.mxu0
        %822 = vrot.lane.b32.xlu0 %v489, 120
        %v823 = vpop.permute.xlu0 %822
        %824 = vrot.lane.b32.xlu0 %v570, 120
        %v825 = vpop.permute.xlu0 %824
        %v826 = vsel %vm659, %v823, 0
        %v828 = vsel %vm659, %v825, 0
        %830 = vmatprep.subr.mxu0 0.0
        %831 = vmatpush1.xpose.msra.mxu0 0.0
        %832 = vmatprep.subr.mxu0 0.0
        %833 = vmatpush1.xpose.msra.mxu0 0.0
        %834 = vmatprep.subr.mxu0 0.0
        %835 = vmatpush1.xpose.msra.mxu0 0.0
        %836 = vmatprep.subr.mxu0 0.0
        %837 = vmatpush1.xpose.msra.mxu0 0.0
        %838 = vmatprep.subr.mxu0 0.0
        %839 = vmatpush1.xpose.msra.mxu0 0.0
        %840 = vmatprep.subr.mxu0 0.0
        %841 = vmatpush1.xpose.msra.mxu0 0.0
        %842 = vmatprep.subr.mxu0 0.0
        %843 = vmatpush1.xpose.msra.mxu0 0.0
        %844 = vmatprep.subr.mxu0 0.0
        %845 = vmatpush1.xpose.msra.mxu0 0.0
        %846 = vmatprep.subr.mxu0 0.0
        %847 = vmatpush1.xpose.msra.mxu0 0.0
        %848 = vmatprep.subr.mxu0 0.0
        %849 = vmatpush1.xpose.msra.mxu0 0.0
        %850 = vmatprep.subr.mxu0 0.0
        %851 = vmatpush1.xpose.msra.mxu0 0.0
        %852 = vmatprep.subr.mxu0 0.0
        %853 = vmatpush1.xpose.msra.mxu0 0.0
        %854 = vmatprep.subr.mxu0 0.0
        %855 = vmatpush1.xpose.msra.mxu0 0.0
        %856 = vmatprep.subr.mxu0 0.0
        %857 = vmatpush1.xpose.msra.mxu0 0.0
        %858 = vmatprep.subr.mxu0 0.0
        %859 = vmatpush1.xpose.msra.mxu0 0.0
        %860 = vmatprep.subr.mxu0 0.0
        %861 = vmatpush1.xpose.msra.mxu0 %v828
        %862 = vmatprep.subr.mxu0 0.0
        %863 = vmatpush2.xpose.msra.mxu0 0.0
        %864 = vmatprep.subr.mxu0 0.0
        %865 = vmatpush2.xpose.msra.mxu0 0.0
        %866 = vmatprep.subr.mxu0 0.0
        %867 = vmatpush2.xpose.msra.mxu0 0.0
        %868 = vmatprep.subr.mxu0 0.0
        %869 = vmatpush2.xpose.msra.mxu0 0.0
        %870 = vmatprep.subr.mxu0 0.0
        %871 = vmatpush2.xpose.msra.mxu0 0.0
        %872 = vmatprep.subr.mxu0 0.0
        %873 = vmatpush2.xpose.msra.mxu0 0.0
        %874 = vmatprep.subr.mxu0 0.0
        %875 = vmatpush2.xpose.msra.mxu0 0.0
        %876 = vmatprep.subr.mxu0 0.0
        %877 = vmatpush2.xpose.msra.mxu0 0.0
        %878 = vmatprep.subr.mxu0 0.0
        %879 = vmatpush2.xpose.msra.mxu0 0.0
        %880 = vmatprep.subr.mxu0 0.0
        %881 = vmatpush2.xpose.msra.mxu0 0.0
        %882 = vmatprep.subr.mxu0 0.0
        %883 = vmatpush2.xpose.msra.mxu0 0.0
        %884 = vmatprep.subr.mxu0 0.0
        %885 = vmatpush2.xpose.msra.mxu0 0.0
        %886 = vmatprep.subr.mxu0 0.0
        %887 = vmatpush2.xpose.msra.mxu0 0.0
        %888 = vmatprep.subr.mxu0 0.0
        %889 = vmatpush2.xpose.msra.mxu0 0.0
        %890 = vmatprep.subr.mxu0 0.0
        %891 = vmatpush2.xpose.msra.mxu0 0.0
        %892 = vmatprep.subr.mxu0 0.0
        %893 = vmatpush2.xpose.msra.mxu0 0.0
        %894 = vmatprep.mubr.f32.mxu0 0.0
        %895 = vmatmul.mubr.f32.gmra.mxu0 %v826
        %v896 = vpop.f32.mrf.mxu0
        %v897 = vadd.f32 0.0, %v896
        %v898 = vpop.f32.mrf.mxu0
        %899 = vdwg.mxu0
        %v900 = vmul.f32 %v897, 0.35355338
        %v901 = vsel %vm658, %v900, -1e+09
        %v902 = vsel %vm659, %v901, -inf
        %903 = vmax.xlane.f32.xlu0 %v902
        %v904 = vpop.xlane.xlu0 %903
        %v905 = vsub.f32 %v901, %v904
        %v906 = vmul.f32 %v905, 1.442695
        %v907 = vpow.pop %v906
        %v908 = vsel %vm659, %v907, 0.0
        %909 = vadd.xlane.f32.xlu0 %v908
        %v910 = vpop.xlane.xlu0 %909
        %v911 = vrcp.pop %v910
        %v912 = vmul.f32 %v907, %v911
        %914 = vrot.lane.b32.xlu0 %v651, 120
        %v915 = vpop.permute.xlu0 %914
        %v918 = vsel %vm659, %v912, 0
        %920 = vmatprep.subr.mxu0 0.0
        %921 = vmatpush1.msra.mxu0 0.0
        %922 = vmatprep.subr.mxu0 0.0
        %923 = vmatpush1.msra.mxu0 0.0
        %924 = vmatprep.subr.mxu0 0.0
        %925 = vmatpush1.msra.mxu0 0.0
        %926 = vmatprep.subr.mxu0 0.0
        %927 = vmatpush1.msra.mxu0 0.0
        %928 = vmatprep.subr.mxu0 0.0
        %929 = vmatpush1.msra.mxu0 0.0
        %930 = vmatprep.subr.mxu0 0.0
        %931 = vmatpush1.msra.mxu0 0.0
        %932 = vmatprep.subr.mxu0 0.0
        %933 = vmatpush1.msra.mxu0 0.0
        %934 = vmatprep.subr.mxu0 0.0
        %935 = vmatpush1.msra.mxu0 0.0
        %936 = vmatprep.subr.mxu0 0.0
        %937 = vmatpush1.msra.mxu0 0.0
        %938 = vmatprep.subr.mxu0 0.0
        %939 = vmatpush1.msra.mxu0 0.0
        %940 = vmatprep.subr.mxu0 0.0
        %941 = vmatpush1.msra.mxu0 0.0
        %942 = vmatprep.subr.mxu0 0.0
        %943 = vmatpush1.msra.mxu0 0.0
        %944 = vmatprep.subr.mxu0 0.0
        %945 = vmatpush1.msra.mxu0 0.0
        %946 = vmatprep.subr.mxu0 0.0
        %947 = vmatpush1.msra.mxu0 0.0
        %948 = vmatprep.subr.mxu0 0.0
        %949 = vmatpush1.msra.mxu0 0.0
        %950 = vmatprep.subr.mxu0 0.0
        %951 = vmatpush1.msra.mxu0 %v915
        %952 = vmatprep.subr.mxu0 0.0
        %953 = vmatpush2.msra.mxu0 0.0
        %954 = vmatprep.subr.mxu0 0.0
        %955 = vmatpush2.msra.mxu0 0.0
        %956 = vmatprep.subr.mxu0 0.0
        %957 = vmatpush2.msra.mxu0 0.0
        %958 = vmatprep.subr.mxu0 0.0
        %959 = vmatpush2.msra.mxu0 0.0
        %960 = vmatprep.subr.mxu0 0.0
        %961 = vmatpush2.msra.mxu0 0.0
        %962 = vmatprep.subr.mxu0 0.0
        %963 = vmatpush2.msra.mxu0 0.0
        %964 = vmatprep.subr.mxu0 0.0
        %965 = vmatpush2.msra.mxu0 0.0
        %966 = vmatprep.subr.mxu0 0.0
        %967 = vmatpush2.msra.mxu0 0.0
        %968 = vmatprep.subr.mxu0 0.0
        %969 = vmatpush2.msra.mxu0 0.0
        %970 = vmatprep.subr.mxu0 0.0
        %971 = vmatpush2.msra.mxu0 0.0
        %972 = vmatprep.subr.mxu0 0.0
        %973 = vmatpush2.msra.mxu0 0.0
        %974 = vmatprep.subr.mxu0 0.0
        %975 = vmatpush2.msra.mxu0 0.0
        %976 = vmatprep.subr.mxu0 0.0
        %977 = vmatpush2.msra.mxu0 0.0
        %978 = vmatprep.subr.mxu0 0.0
        %979 = vmatpush2.msra.mxu0 0.0
        %980 = vmatprep.subr.mxu0 0.0
        %981 = vmatpush2.msra.mxu0 0.0
        %982 = vmatprep.subr.mxu0 0.0
        %983 = vmatpush2.msra.mxu0 0.0
        %984 = vmatprep.mubr.f32.mxu0 0.0
        %985 = vmatmul.mubr.f32.gmra.mxu0 %v918
        %v986 = vpop.f32.mrf.mxu0
        %v987 = vadd.f32 0.0, %v986
        %v988 = vpop.f32.mrf.mxu0
        %989 = vdwg.mxu0
        %990 = vrot.lane.b32.xlu0 %v489, 112
        %v991 = vpop.permute.xlu0 %990
        %992 = vrot.lane.b32.xlu0 %v570, 112
        %v993 = vpop.permute.xlu0 %992
        %v994 = vsel %vm659, %v991, 0
        %v996 = vsel %vm659, %v993, 0
        %998 = vmatprep.subr.mxu0 0.0
        %999 = vmatpush1.xpose.msra.mxu0 0.0
        %1000 = vmatprep.subr.mxu0 0.0
        %1001 = vmatpush1.xpose.msra.mxu0 0.0
        %1002 = vmatprep.subr.mxu0 0.0
        %1003 = vmatpush1.xpose.msra.mxu0 0.0
        %1004 = vmatprep.subr.mxu0 0.0
        %1005 = vmatpush1.xpose.msra.mxu0 0.0
        %1006 = vmatprep.subr.mxu0 0.0
        %1007 = vmatpush1.xpose.msra.mxu0 0.0
        %1008 = vmatprep.subr.mxu0 0.0
        %1009 = vmatpush1.xpose.msra.mxu0 0.0
        %1010 = vmatprep.subr.mxu0 0.0
        %1011 = vmatpush1.xpose.msra.mxu0 0.0
        %1012 = vmatprep.subr.mxu0 0.0
        %1013 = vmatpush1.xpose.msra.mxu0 0.0
        %1014 = vmatprep.subr.mxu0 0.0
        %1015 = vmatpush1.xpose.msra.mxu0 0.0
        %1016 = vmatprep.subr.mxu0 0.0
        %1017 = vmatpush1.xpose.msra.mxu0 0.0
        %1018 = vmatprep.subr.mxu0 0.0
        %1019 = vmatpush1.xpose.msra.mxu0 0.0
        %1020 = vmatprep.subr.mxu0 0.0
        %1021 = vmatpush1.xpose.msra.mxu0 0.0
        %1022 = vmatprep.subr.mxu0 0.0
        %1023 = vmatpush1.xpose.msra.mxu0 0.0
        %1024 = vmatprep.subr.mxu0 0.0
        %1025 = vmatpush1.xpose.msra.mxu0 0.0
        %1026 = vmatprep.subr.mxu0 0.0
        %1027 = vmatpush1.xpose.msra.mxu0 0.0
        %1028 = vmatprep.subr.mxu0 0.0
        %1029 = vmatpush1.xpose.msra.mxu0 %v996
        %1030 = vmatprep.subr.mxu0 0.0
        %1031 = vmatpush2.xpose.msra.mxu0 0.0
        %1032 = vmatprep.subr.mxu0 0.0
        %1033 = vmatpush2.xpose.msra.mxu0 0.0
        %1034 = vmatprep.subr.mxu0 0.0
        %1035 = vmatpush2.xpose.msra.mxu0 0.0
        %1036 = vmatprep.subr.mxu0 0.0
        %1037 = vmatpush2.xpose.msra.mxu0 0.0
        %1038 = vmatprep.subr.mxu0 0.0
        %1039 = vmatpush2.xpose.msra.mxu0 0.0
        %1040 = vmatprep.subr.mxu0 0.0
        %1041 = vmatpush2.xpose.msra.mxu0 0.0
        %1042 = vmatprep.subr.mxu0 0.0
        %1043 = vmatpush2.xpose.msra.mxu0 0.0
        %1044 = vmatprep.subr.mxu0 0.0
        %1045 = vmatpush2.xpose.msra.mxu0 0.0
        %1046 = vmatprep.subr.mxu0 0.0
        %1047 = vmatpush2.xpose.msra.mxu0 0.0
        %1048 = vmatprep.subr.mxu0 0.0
        %1049 = vmatpush2.xpose.msra.mxu0 0.0
        %1050 = vmatprep.subr.mxu0 0.0
        %1051 = vmatpush2.xpose.msra.mxu0 0.0
        %1052 = vmatprep.subr.mxu0 0.0
        %1053 = vmatpush2.xpose.msra.mxu0 0.0
        %1054 = vmatprep.subr.mxu0 0.0
        %1055 = vmatpush2.xpose.msra.mxu0 0.0
        %1056 = vmatprep.subr.mxu0 0.0
        %1057 = vmatpush2.xpose.msra.mxu0 0.0
        %1058 = vmatprep.subr.mxu0 0.0
        %1059 = vmatpush2.xpose.msra.mxu0 0.0
        %1060 = vmatprep.subr.mxu0 0.0
        %1061 = vmatpush2.xpose.msra.mxu0 0.0
        %1062 = vmatprep.mubr.f32.mxu0 0.0
        %1063 = vmatmul.mubr.f32.gmra.mxu0 %v994
        %v1064 = vpop.f32.mrf.mxu0
        %v1065 = vadd.f32 0.0, %v1064
        %v1066 = vpop.f32.mrf.mxu0
        %1067 = vdwg.mxu0
        %v1068 = vmul.f32 %v1065, 0.35355338
        %v1069 = vsel %vm658, %v1068, -1e+09
        %v1070 = vsel %vm659, %v1069, -inf
        %1071 = vmax.xlane.f32.xlu0 %v1070
        %v1072 = vpop.xlane.xlu0 %1071
        %v1073 = vsub.f32 %v1069, %v1072
        %v1074 = vmul.f32 %v1073, 1.442695
        %v1075 = vpow.pop %v1074
        %v1076 = vsel %vm659, %v1075, 0.0
        %1077 = vadd.xlane.f32.xlu0 %v1076
        %v1078 = vpop.xlane.xlu0 %1077
        %v1079 = vrcp.pop %v1078
        %v1080 = vmul.f32 %v1075, %v1079
        %1081 = vrot.lane.b32.xlu0 %v651, 112
        %v1082 = vpop.permute.xlu0 %1081
        %v1085 = vsel %vm659, %v1080, 0
        %1087 = vmatprep.subr.mxu0 0.0
        %1088 = vmatpush1.msra.mxu0 0.0
        %1089 = vmatprep.subr.mxu0 0.0
        %1090 = vmatpush1.msra.mxu0 0.0
        %1091 = vmatprep.subr.mxu0 0.0
        %1092 = vmatpush1.msra.mxu0 0.0
        %1093 = vmatprep.subr.mxu0 0.0
        %1094 = vmatpush1.msra.mxu0 0.0
        %1095 = vmatprep.subr.mxu0 0.0
        %1096 = vmatpush1.msra.mxu0 0.0
        %1097 = vmatprep.subr.mxu0 0.0
        %1098 = vmatpush1.msra.mxu0 0.0
        %1099 = vmatprep.subr.mxu0 0.0
        %1100 = vmatpush1.msra.mxu0 0.0
        %1101 = vmatprep.subr.mxu0 0.0
        %1102 = vmatpush1.msra.mxu0 0.0
        %1103 = vmatprep.subr.mxu0 0.0
        %1104 = vmatpush1.msra.mxu0 0.0
        %1105 = vmatprep.subr.mxu0 0.0
        %1106 = vmatpush1.msra.mxu0 0.0
        %1107 = vmatprep.subr.mxu0 0.0
        %1108 = vmatpush1.msra.mxu0 0.0
        %1109 = vmatprep.subr.mxu0 0.0
        %1110 = vmatpush1.msra.mxu0 0.0
        %1111 = vmatprep.subr.mxu0 0.0
        %1112 = vmatpush1.msra.mxu0 0.0
        %1113 = vmatprep.subr.mxu0 0.0
        %1114 = vmatpush1.msra.mxu0 0.0
        %1115 = vmatprep.subr.mxu0 0.0
        %1116 = vmatpush1.msra.mxu0 0.0
        %1117 = vmatprep.subr.mxu0 0.0
        %1118 = vmatpush1.msra.mxu0 %v1082
        %1119 = vmatprep.subr.mxu0 0.0
        %1120 = vmatpush2.msra.mxu0 0.0
        %1121 = vmatprep.subr.mxu0 0.0
        %1122 = vmatpush2.msra.mxu0 0.0
        %1123 = vmatprep.subr.mxu0 0.0
        %1124 = vmatpush2.msra.mxu0 0.0
        %1125 = vmatprep.subr.mxu0 0.0
        %1126 = vmatpush2.msra.mxu0 0.0
        %1127 = vmatprep.subr.mxu0 0.0
        %1128 = vmatpush2.msra.mxu0 0.0
        %1129 = vmatprep.subr.mxu0 0.0
        %1130 = vmatpush2.msra.mxu0 0.0
        %1131 = vmatprep.subr.mxu0 0.0
        %1132 = vmatpush2.msra.mxu0 0.0
        %1133 = vmatprep.subr.mxu0 0.0
        %1134 = vmatpush2.msra.mxu0 0.0
        %1135 = vmatprep.subr.mxu0 0.0
        %1136 = vmatpush2.msra.mxu0 0.0
        %1137 = vmatprep.subr.mxu0 0.0
        %1138 = vmatpush2.msra.mxu0 0.0
        %1139 = vmatprep.subr.mxu0 0.0
        %1140 = vmatpush2.msra.mxu0 0.0
        %1141 = vmatprep.subr.mxu0 0.0
        %1142 = vmatpush2.msra.mxu0 0.0
        %1143 = vmatprep.subr.mxu0 0.0
        %1144 = vmatpush2.msra.mxu0 0.0
        %1145 = vmatprep.subr.mxu0 0.0
        %1146 = vmatpush2.msra.mxu0 0.0
        %1147 = vmatprep.subr.mxu0 0.0
        %1148 = vmatpush2.msra.mxu0 0.0
        %1149 = vmatprep.subr.mxu0 0.0
        %1150 = vmatpush2.msra.mxu0 0.0
        %1151 = vmatprep.mubr.f32.mxu0 0.0
        %1152 = vmatmul.mubr.f32.gmra.mxu0 %v1085
        %v1153 = vpop.f32.mrf.mxu0
        %v1154 = vadd.f32 0.0, %v1153
        %v1155 = vpop.f32.mrf.mxu0
        %1156 = vdwg.mxu0
        %1157 = vrot.lane.b32.xlu0 %v489, 104
        %v1158 = vpop.permute.xlu0 %1157
        %1159 = vrot.lane.b32.xlu0 %v570, 104
        %v1160 = vpop.permute.xlu0 %1159
        %v1161 = vsel %vm659, %v1158, 0
        %v1163 = vsel %vm659, %v1160, 0
        %1165 = vmatprep.subr.mxu0 0.0
        %1166 = vmatpush1.xpose.msra.mxu0 0.0
        %1167 = vmatprep.subr.mxu0 0.0
        %1168 = vmatpush1.xpose.msra.mxu0 0.0
        %1169 = vmatprep.subr.mxu0 0.0
        %1170 = vmatpush1.xpose.msra.mxu0 0.0
        %1171 = vmatprep.subr.mxu0 0.0
        %1172 = vmatpush1.xpose.msra.mxu0 0.0
        %1173 = vmatprep.subr.mxu0 0.0
        %1174 = vmatpush1.xpose.msra.mxu0 0.0
        %1175 = vmatprep.subr.mxu0 0.0
        %1176 = vmatpush1.xpose.msra.mxu0 0.0
        %1177 = vmatprep.subr.mxu0 0.0
        %1178 = vmatpush1.xpose.msra.mxu0 0.0
        %1179 = vmatprep.subr.mxu0 0.0
        %1180 = vmatpush1.xpose.msra.mxu0 0.0
        %1181 = vmatprep.subr.mxu0 0.0
        %1182 = vmatpush1.xpose.msra.mxu0 0.0
        %1183 = vmatprep.subr.mxu0 0.0
        %1184 = vmatpush1.xpose.msra.mxu0 0.0
        %1185 = vmatprep.subr.mxu0 0.0
        %1186 = vmatpush1.xpose.msra.mxu0 0.0
        %1187 = vmatprep.subr.mxu0 0.0
        %1188 = vmatpush1.xpose.msra.mxu0 0.0
        %1189 = vmatprep.subr.mxu0 0.0
        %1190 = vmatpush1.xpose.msra.mxu0 0.0
        %1191 = vmatprep.subr.mxu0 0.0
        %1192 = vmatpush1.xpose.msra.mxu0 0.0
        %1193 = vmatprep.subr.mxu0 0.0
        %1194 = vmatpush1.xpose.msra.mxu0 0.0
        %1195 = vmatprep.subr.mxu0 0.0
        %1196 = vmatpush1.xpose.msra.mxu0 %v1163
        %1197 = vmatprep.subr.mxu0 0.0
        %1198 = vmatpush2.xpose.msra.mxu0 0.0
        %1199 = vmatprep.subr.mxu0 0.0
        %1200 = vmatpush2.xpose.msra.mxu0 0.0
        %1201 = vmatprep.subr.mxu0 0.0
        %1202 = vmatpush2.xpose.msra.mxu0 0.0
        %1203 = vmatprep.subr.mxu0 0.0
        %1204 = vmatpush2.xpose.msra.mxu0 0.0
        %1205 = vmatprep.subr.mxu0 0.0
        %1206 = vmatpush2.xpose.msra.mxu0 0.0
        %1207 = vmatprep.subr.mxu0 0.0
        %1208 = vmatpush2.xpose.msra.mxu0 0.0
        %1209 = vmatprep.subr.mxu0 0.0
        %1210 = vmatpush2.xpose.msra.mxu0 0.0
        %1211 = vmatprep.subr.mxu0 0.0
        %1212 = vmatpush2.xpose.msra.mxu0 0.0
        %1213 = vmatprep.subr.mxu0 0.0
        %1214 = vmatpush2.xpose.msra.mxu0 0.0
        %1215 = vmatprep.subr.mxu0 0.0
        %1216 = vmatpush2.xpose.msra.mxu0 0.0
        %1217 = vmatprep.subr.mxu0 0.0
        %1218 = vmatpush2.xpose.msra.mxu0 0.0
        %1219 = vmatprep.subr.mxu0 0.0
        %1220 = vmatpush2.xpose.msra.mxu0 0.0
        %1221 = vmatprep.subr.mxu0 0.0
        %1222 = vmatpush2.xpose.msra.mxu0 0.0
        %1223 = vmatprep.subr.mxu0 0.0
        %1224 = vmatpush2.xpose.msra.mxu0 0.0
        %1225 = vmatprep.subr.mxu0 0.0
        %1226 = vmatpush2.xpose.msra.mxu0 0.0
        %1227 = vmatprep.subr.mxu0 0.0
        %1228 = vmatpush2.xpose.msra.mxu0 0.0
        %1229 = vmatprep.mubr.f32.mxu0 0.0
        %1230 = vmatmul.mubr.f32.gmra.mxu0 %v1161
        %v1231 = vpop.f32.mrf.mxu0
        %v1232 = vadd.f32 0.0, %v1231
        %v1233 = vpop.f32.mrf.mxu0
        %1234 = vdwg.mxu0
        %v1235 = vmul.f32 %v1232, 0.35355338
        %v1236 = vsel %vm658, %v1235, -1e+09
        %v1237 = vsel %vm659, %v1236, -inf
        %1238 = vmax.xlane.f32.xlu0 %v1237
        %v1239 = vpop.xlane.xlu0 %1238
        %v1240 = vsub.f32 %v1236, %v1239
        %v1241 = vmul.f32 %v1240, 1.442695
        %v1242 = vpow.pop %v1241
        %v1243 = vsel %vm659, %v1242, 0.0
        %1244 = vadd.xlane.f32.xlu0 %v1243
        %v1245 = vpop.xlane.xlu0 %1244
        %v1246 = vrcp.pop %v1245
        %v1247 = vmul.f32 %v1242, %v1246
        %1248 = vrot.lane.b32.xlu0 %v651, 104
        %v1249 = vpop.permute.xlu0 %1248
        %v1252 = vsel %vm659, %v1247, 0
        %1254 = vmatprep.subr.mxu0 0.0
        %1255 = vmatpush1.msra.mxu0 0.0
        %1256 = vmatprep.subr.mxu0 0.0
        %1257 = vmatpush1.msra.mxu0 0.0
        %1258 = vmatprep.subr.mxu0 0.0
        %1259 = vmatpush1.msra.mxu0 0.0
        %1260 = vmatprep.subr.mxu0 0.0
        %1261 = vmatpush1.msra.mxu0 0.0
        %1262 = vmatprep.subr.mxu0 0.0
        %1263 = vmatpush1.msra.mxu0 0.0
        %1264 = vmatprep.subr.mxu0 0.0
        %1265 = vmatpush1.msra.mxu0 0.0
        %1266 = vmatprep.subr.mxu0 0.0
        %1267 = vmatpush1.msra.mxu0 0.0
        %1268 = vmatprep.subr.mxu0 0.0
        %1269 = vmatpush1.msra.mxu0 0.0
        %1270 = vmatprep.subr.mxu0 0.0
        %1271 = vmatpush1.msra.mxu0 0.0
        %1272 = vmatprep.subr.mxu0 0.0
        %1273 = vmatpush1.msra.mxu0 0.0
        %1274 = vmatprep.subr.mxu0 0.0
        %1275 = vmatpush1.msra.mxu0 0.0
        %1276 = vmatprep.subr.mxu0 0.0
        %1277 = vmatpush1.msra.mxu0 0.0
        %1278 = vmatprep.subr.mxu0 0.0
        %1279 = vmatpush1.msra.mxu0 0.0
        %1280 = vmatprep.subr.mxu0 0.0
        %1281 = vmatpush1.msra.mxu0 0.0
        %1282 = vmatprep.subr.mxu0 0.0
        %1283 = vmatpush1.msra.mxu0 0.0
        %1284 = vmatprep.subr.mxu0 0.0
        %1285 = vmatpush1.msra.mxu0 %v1249
        %1286 = vmatprep.subr.mxu0 0.0
        %1287 = vmatpush2.msra.mxu0 0.0
        %1288 = vmatprep.subr.mxu0 0.0
        %1289 = vmatpush2.msra.mxu0 0.0
        %1290 = vmatprep.subr.mxu0 0.0
        %1291 = vmatpush2.msra.mxu0 0.0
        %1292 = vmatprep.subr.mxu0 0.0
        %1293 = vmatpush2.msra.mxu0 0.0
        %1294 = vmatprep.subr.mxu0 0.0
        %1295 = vmatpush2.msra.mxu0 0.0
        %1296 = vmatprep.subr.mxu0 0.0
        %1297 = vmatpush2.msra.mxu0 0.0
        %1298 = vmatprep.subr.mxu0 0.0
        %1299 = vmatpush2.msra.mxu0 0.0
        %1300 = vmatprep.subr.mxu0 0.0
        %1301 = vmatpush2.msra.mxu0 0.0
        %1302 = vmatprep.subr.mxu0 0.0
        %1303 = vmatpush2.msra.mxu0 0.0
        %1304 = vmatprep.subr.mxu0 0.0
        %1305 = vmatpush2.msra.mxu0 0.0
        %1306 = vmatprep.subr.mxu0 0.0
        %1307 = vmatpush2.msra.mxu0 0.0
        %1308 = vmatprep.subr.mxu0 0.0
        %1309 = vmatpush2.msra.mxu0 0.0
        %1310 = vmatprep.subr.mxu0 0.0
        %1311 = vmatpush2.msra.mxu0 0.0
        %1312 = vmatprep.subr.mxu0 0.0
        %1313 = vmatpush2.msra.mxu0 0.0
        %1314 = vmatprep.subr.mxu0 0.0
        %1315 = vmatpush2.msra.mxu0 0.0
        %1316 = vmatprep.subr.mxu0 0.0
        %1317 = vmatpush2.msra.mxu0 0.0
        %1318 = vmatprep.mubr.f32.mxu0 0.0
        %1319 = vmatmul.mubr.f32.gmra.mxu0 %v1252
        %v1320 = vpop.f32.mrf.mxu0
        %v1321 = vadd.f32 0.0, %v1320
        %v1322 = vpop.f32.mrf.mxu0
        %1323 = vdwg.mxu0
        %1325 = vrot.lane.b32.xlu0 %v987, 8
        %v1326 = vpop.permute.xlu0 %1325
        %1329 = vrot.lane.b32.xlu0 %v1154, 16
        %v1330 = vpop.permute.xlu0 %1329
        %1333 = vrot.lane.b32.xlu0 %v1321, 24
        %v1334 = vpop.permute.xlu0 %1333
        %v1336 = vsel %vm659, %v819, %v1326
        %vm1337 = vcmask 130048
        %v1338 = vsel %vm1337, %v1336, %v1330
        %vm1339 = vcmask 195584
        %v1340 = vsel %vm1339, %v1338, %v1334
        %v1341 = vld [vmem:[#allocation10] sm:$0xff]
        %v1342 = vld [vmem:[#allocation10 + $0x8] sm:$0xff]
        %v1343 = vld [vmem:[#allocation10 + $0x10] sm:$0xff]
        %v1344 = vld [vmem:[#allocation10 + $0x18] sm:$0xff]
        %v1345 = vld [vmem:[%s8] sm:$0x1]
        %v1347 = vlaneseq
        %v1348 = vshrl.u32 %v1347, 7
        %v1349 = vsub.s32 0, %v1348
        %v1350 = vrot.slane %v1345, %v1349
        %v1353 = vsel %vm418, %v1340, 0
        %1355 = vmatprep.subr.mxu0 0.0
        %1356 = vmatpush1.msra.mxu0 0.0
        %1357 = vmatprep.subr.mxu0 0.0
        %1358 = vmatpush1.msra.mxu0 0.0
        %1359 = vmatprep.subr.mxu0 0.0
        %1360 = vmatpush1.msra.mxu0 0.0
        %1361 = vmatprep.subr.mxu0 0.0
        %1362 = vmatpush1.msra.mxu0 0.0
        %1363 = vmatprep.subr.mxu0 0.0
        %1364 = vmatpush1.msra.mxu0 0.0
        %1365 = vmatprep.subr.mxu0 0.0
        %1366 = vmatpush1.msra.mxu0 0.0
        %1367 = vmatprep.subr.mxu0 0.0
        %1368 = vmatpush1.msra.mxu0 0.0
        %1369 = vmatprep.subr.mxu0 0.0
        %1370 = vmatpush1.msra.mxu0 0.0
        %1371 = vmatprep.subr.mxu0 0.0
        %1372 = vmatpush1.msra.mxu0 0.0
        %1373 = vmatprep.subr.mxu0 0.0
        %1374 = vmatpush1.msra.mxu0 0.0
        %1375 = vmatprep.subr.mxu0 0.0
        %1376 = vmatpush1.msra.mxu0 0.0
        %1377 = vmatprep.subr.mxu0 0.0
        %1378 = vmatpush1.msra.mxu0 0.0
        %1379 = vmatprep.subr.mxu0 0.0
        %1380 = vmatpush1.msra.mxu0 %v1344
        %1381 = vmatprep.subr.mxu0 0.0
        %1382 = vmatpush1.msra.mxu0 %v1343
        %1383 = vmatprep.subr.mxu0 0.0
        %1384 = vmatpush1.msra.mxu0 %v1342
        %1385 = vmatprep.subr.mxu0 0.0
        %1386 = vmatpush1.msra.mxu0 %v1341
        %1387 = vmatprep.subr.mxu0 0.0
        %1388 = vmatpush2.msra.mxu0 0.0
        %1389 = vmatprep.subr.mxu0 0.0
        %1390 = vmatpush2.msra.mxu0 0.0
        %1391 = vmatprep.subr.mxu0 0.0
        %1392 = vmatpush2.msra.mxu0 0.0
        %1393 = vmatprep.subr.mxu0 0.0
        %1394 = vmatpush2.msra.mxu0 0.0
        %1395 = vmatprep.subr.mxu0 0.0
        %1396 = vmatpush2.msra.mxu0 0.0
        %1397 = vmatprep.subr.mxu0 0.0
        %1398 = vmatpush2.msra.mxu0 0.0
        %1399 = vmatprep.subr.mxu0 0.0
        %1400 = vmatpush2.msra.mxu0 0.0
        %1401 = vmatprep.subr.mxu0 0.0
        %1402 = vmatpush2.msra.mxu0 0.0
        %1403 = vmatprep.subr.mxu0 0.0
        %1404 = vmatpush2.msra.mxu0 0.0
        %1405 = vmatprep.subr.mxu0 0.0
        %1406 = vmatpush2.msra.mxu0 0.0
        %1407 = vmatprep.subr.mxu0 0.0
        %1408 = vmatpush2.msra.mxu0 0.0
        %1409 = vmatprep.subr.mxu0 0.0
        %1410 = vmatpush2.msra.mxu0 0.0
        %1411 = vmatprep.subr.mxu0 0.0
        %1412 = vmatpush2.msra.mxu0 0.0
        %1413 = vmatprep.subr.mxu0 0.0
        %1414 = vmatpush2.msra.mxu0 0.0
        %1415 = vmatprep.subr.mxu0 0.0
        %1416 = vmatpush2.msra.mxu0 0.0
        %1417 = vmatprep.subr.mxu0 0.0
        %1418 = vmatpush2.msra.mxu0 0.0
        %1419 = vmatprep.mubr.f32.mxu0 0.0
        %1420 = vmatmul.mubr.f32.gmra.mxu0 %v1353
        %v1421 = vpop.f32.mrf.mxu0
        %v1422 = vadd.f32 %v1350, %v1421
        %v1423 = vpop.f32.mrf.mxu0
        %1424 = vdwg.mxu0
        %1425 = vst.msk [vmem:[%s405] sm:$0xff] %vm418, %v1422
        %s1426 = sand.u32 %s230, 1
        %s1427 = scalar_lea.sflag [#allocation4], %s1426
        %s1428 = sand.u32 %s230, 1
        %s1429 = smul.addr %s1428, 8
        %s1430 = scalar_lea.vmem [#allocation11], %s1429
        // Predicated region
        $region77: #{tpu_custom_call.1} parent=55 // pred_check
          %p1431 = pneg %p240
        $region78: #{tpu_custom_call.1} parent=55 // pred_check_branch
          %1433 = sbr.rel (%p1431) target = $region80
        $region79: #{tpu_custom_call.1} parent=55 // pred_region
          %s1435 = ssub.s32 128, 128
          %1436 = vsyncadd %s1427, %s1435
          %s1437 = smul.addr %s28, 128
          %s1438 = scalar_lea.hbm %s9, %s1437
          %s1440 = sshll.u32 %s1430, 4
          %s1441 = int_to_ptr.vmem [resolvable:$true] %s1440
          %1443 = dma.vmem_to_hbm [thread:$0]  %s1441, 128, %s1438, %s1427
        $region80: #{tpu_custom_call.1} parent=55 // pred_fallthru
          _
      $region56: #{tpu_custom_call.1} parent=5 // pred_fallthru
        _
      %p1444 = scmp.le.s32.totalorder 2, %s23
      // Predicated region
      $region81: #{tpu_custom_call.1} parent=5 // pred_check
        %p1445 = pneg %p1444
      $region82: #{tpu_custom_call.1} parent=5 // pred_check_branch
        %1447 = sbr.rel (%p1445) target = $region84
      $region83: #{tpu_custom_call.1} parent=5 // pred_region
        %s1448 = ssub.s32 %s23, 2
        // Predicated region
        $region85: #{tpu_custom_call.1} parent=83 // pred_check
          %p1449 = pneg %p246
        $region86: #{tpu_custom_call.1} parent=83 // pred_check_branch
          %1451 = sbr.rel (%p1449) target = $region88
        $region87: #{tpu_custom_call.1} parent=83 // pred_region
          %s1452 = sand.u32 %s231, 1
          %s1453 = scalar_lea.sflag [#allocation4], %s1452
          %s1454 = sand.u32 %s231, 1
          %s1455 = smul.addr %s1454, 8
          %s1456 = scalar_lea.vmem [#allocation11], %s1455
          %1457 = dma.done %s1453, 128
        $region88: #{tpu_custom_call.1} parent=83 // pred_fallthru
          _
      $region84: #{tpu_custom_call.1} parent=5 // pred_fallthru
        _
    $region6: #{tpu_custom_call.1} parent=1 // loop_footer
      %s27 = sadd.s32 1, %s23
    $region7: #{tpu_custom_call.1} parent=1 // loop_footer_branch
      %22 = sbr.rel target = $region3
    $region8: #{tpu_custom_call.1} parent=1 // loop_exit
      _
    %1458 = vsyncpa [#allocation3], 1
    %s1459 = scalar_lea.sflag [#allocation3], 1
    %1460 = vsyncpa %s1459, 1
    %1461 = vsyncpa [#allocation6], 1
    %1462 = vsyncpa [#allocation9], 1
    %1463 = vsyncpa [#allocation4], 1
    %s1464 = scalar_lea.sflag [#allocation4], 1
    %1465 = vsyncpa %s1464, 1

</llo_original>
